<compile_context>
chip_gen: v6e
topology: v6e:2x2x1
jax: 0.10.0
libtpu: 0.0.40
codegen_flags: <defaults>
</compile_context>

<pallas_src>
import math

import jax
import jax.numpy as jnp
from jax.experimental import pallas as pl
from jax.experimental.pallas import tpu as pltpu

# ----------------------- config (small synthetic shapes) ----------------------
N = 2                      # batch
SEQ = 8                    # value_len == key_len == query_len
HEADS = 4
EMBED = 32
HEAD_DIM = EMBED // HEADS
HIDDEN = 4 * EMBED         # 128 -> lane-dense FFN hidden
NS = N * SEQ               # flattened (batch, seq) rows = 16
LN_EPS = 1e-5
assert HEAD_DIM * HEADS == EMBED

# ------------------------ parameter-slab row layout ---------------------------
R_MATS = 0                 # rows [0,32)  : [Wq_bd | Wk_bd | Wv_bd | Wo^T], 32 lanes each
R_W1 = EMBED               # rows [32,64) : w1.T   (EMBED, HIDDEN)
R_W2 = 2 * EMBED           # rows [64,96) : w2     (EMBED, HIDDEN) natural layout
R_B1 = 3 * EMBED           # row 96       : b1     (1, HIDDEN)
R_MISC1 = R_B1 + 1         # row 97       : [bo | gamma1 | beta1 | gamma2]
R_MISC2 = R_B1 + 2         # row 98       : [beta2 | b2 | zeros]
PAR_ROWS = 104             # padded to a multiple of 8 sublanes


# --------------------------------- kernel -------------------------------------
def _layer_norm(x, gamma, beta):
    mu = jnp.mean(x, axis=-1, keepdims=True)
    xc = x - mu
    var = jnp.mean(xc * xc, axis=-1, keepdims=True)
    return xc * jax.lax.rsqrt(var + LN_EPS) * gamma + beta


def transformer_block_kernel(act_ref, par_ref, o_ref):
    # ---- unpack the single activation slab: rows [0:16) value, [16:32) key, [32:48) query
    v_flat = act_ref[0 * NS:1 * NS, :]
    k_flat = act_ref[1 * NS:2 * NS, :]
    q_flat = act_ref[2 * NS:3 * NS, :]

    # ---- unpack the single parameter slab (static slices)
    wq_bd = par_ref[R_MATS:R_MATS + EMBED, 0 * EMBED:1 * EMBED]   # kron(I, wq.T) * scale
    wk_bd = par_ref[R_MATS:R_MATS + EMBED, 1 * EMBED:2 * EMBED]   # kron(I, wk.T)
    wv_bd = par_ref[R_MATS:R_MATS + EMBED, 2 * EMBED:3 * EMBED]   # kron(I, wv.T)
    wo_t = par_ref[R_MATS:R_MATS + EMBED, 3 * EMBED:4 * EMBED]    # fc_out weight, transposed
    w1_t = par_ref[R_W1:R_W1 + EMBED, :]                          # (EMBED, HIDDEN)
    w2 = par_ref[R_W2:R_W2 + EMBED, :]                            # (EMBED, HIDDEN) natural
    b1 = par_ref[R_B1:R_B1 + 1, :]                                # (1, HIDDEN)
    bo = par_ref[R_MISC1:R_MISC1 + 1, 0 * EMBED:1 * EMBED]
    g1 = par_ref[R_MISC1:R_MISC1 + 1, 1 * EMBED:2 * EMBED]
    be1 = par_ref[R_MISC1:R_MISC1 + 1, 2 * EMBED:3 * EMBED]
    g2 = par_ref[R_MISC1:R_MISC1 + 1, 3 * EMBED:4 * EMBED]
    be2 = par_ref[R_MISC2:R_MISC2 + 1, 0 * EMBED:1 * EMBED]
    b2 = par_ref[R_MISC2:R_MISC2 + 1, 1 * EMBED:2 * EMBED]

    # ---- per-head projections folded into single (NS,EMBED)@(EMBED,EMBED) matmuls
    #      (block-diagonal weights; 1/sqrt(embed_size) pre-folded into wq_bd)
    qp = jnp.dot(q_flat, wq_bd, preferred_element_type=jnp.float32)
    kp = jnp.dot(k_flat, wk_bd, preferred_element_type=jnp.float32)
    vp = jnp.dot(v_flat, wv_bd, preferred_element_type=jnp.float32)

    # ---- attention: only scores / softmax / weighted-sum stay per-head
    qp3 = qp.reshape(N, SEQ, EMBED)   # tile-aligned leading split: free relayout
    kp3 = kp.reshape(N, SEQ, EMBED)
    vp3 = vp.reshape(N, SEQ, EMBED)

    # TODO(synk): masked_fill path for a non-None attention mask is not implemented.
    ctx_heads = []
    for h in range(HEADS):            # static 4-step unroll: lane slices + tiny einsums only
        sl = slice(h * HEAD_DIM, (h + 1) * HEAD_DIM)
        qh, kh, vh = qp3[:, :, sl], kp3[:, :, sl], vp3[:, :, sl]      # (N, SEQ, HEAD_DIM)
        e = jnp.einsum('nqd,nkd->nqk', qh, kh, preferred_element_type=jnp.float32)
        e = e - jnp.max(e, axis=-1, keepdims=True)
        p = jnp.exp(e)
        a = p / jnp.sum(p, axis=-1, keepdims=True)    # exact divide (overhead-bound kernel)
        ctx_heads.append(jnp.einsum('nqk,nkd->nqd', a, vh,
                                    preferred_element_type=jnp.float32))
    # re-interleave heads back into a flat (NS, EMBED) slab
    ctx = jnp.concatenate(ctx_heads, axis=-1).reshape(NS, EMBED)

    # ---- fc_out as ONE (NS,EMBED)@(EMBED,EMBED) matmul, residual + LayerNorm1
    attn_out = jnp.dot(ctx, wo_t, preferred_element_type=jnp.float32) + bo
    x = _layer_norm(attn_out + q_flat, g1, be1)       # nn.Dropout == identity (eval mode)

    # ---- feed-forward (lane-dense (NS, 128) hidden), residual + LayerNorm2
    hdn = jnp.maximum(jnp.dot(x, w1_t, preferred_element_type=jnp.float32) + b1, 0.0)
    y = jnp.einsum('nk,ek->ne', hdn, w2, preferred_element_type=jnp.float32) + b2
    o_ref[...] = _layer_norm(y + x, g2, be2).astype(o_ref.dtype)   # dropout == identity


# --------------------------------- wrapper ------------------------------------
def transformer_block(value, key, query, params):
    assert query.shape == (N, SEQ, EMBED)

    # --- single activation slab: [value; key; query] flattened -> (3*NS, EMBED)
    act = jnp.concatenate([value.reshape(NS, EMBED),
                           key.reshape(NS, EMBED),
                           query.reshape(NS, EMBED)], axis=0).astype(jnp.float32)

    # --- single parameter slab (PAR_ROWS, HIDDEN): one-time XLA layout plumbing
    scale = 1.0 / math.sqrt(float(EMBED))             # module divides by embed_size**0.5
    eye_h = jnp.eye(HEADS, dtype=jnp.float32)
    wq_bd = jnp.kron(eye_h, params['wq'].T * scale)   # fold softmax scale into Wq
    wk_bd = jnp.kron(eye_h, params['wk'].T)
    wv_bd = jnp.kron(eye_h, params['wv'].T)
    mats = jnp.concatenate([wq_bd, wk_bd, wv_bd, params['wo'].T], axis=1)   # (EMBED, 4*EMBED)

    misc1 = jnp.concatenate([params['bo'], params['g1'],
                             params['beta1'], params['g2']]).reshape(1, HIDDEN)
    misc2 = jnp.concatenate([params['beta2'], params['b2'],
                             jnp.zeros((HIDDEN - 2 * EMBED,), jnp.float32)]).reshape(1, HIDDEN)
    par = jnp.concatenate([
        mats,                                   # rows [0, 32)
        params['w1'].T,                         # rows [32, 64)  (EMBED, HIDDEN)
        params['w2'],                           # rows [64, 96)  (EMBED, HIDDEN) natural
        params['b1'].reshape(1, HIDDEN),        # row 96
        misc1,                                  # row 97
        misc2,                                  # row 98
        jnp.zeros((PAR_ROWS - (3 * EMBED + 3), HIDDEN), jnp.float32),   # pad to 104 rows
    ], axis=0).astype(jnp.float32)

    out = pl.pallas_call(
        transformer_block_kernel,
        out_shape=jax.ShapeDtypeStruct((NS, EMBED), jnp.float32),
        grid_spec=pltpu.PrefetchScalarGridSpec(
            num_scalar_prefetch=0,
            grid=(1,),                          # whole problem is VMEM-resident in one step
            in_specs=[pl.BlockSpec((3 * NS, EMBED), lambda i: (0, 0)),
                      pl.BlockSpec((PAR_ROWS, HIDDEN), lambda i: (0, 0))],
            out_specs=pl.BlockSpec((NS, EMBED), lambda i: (0, 0)),
        ),
        compiler_params=pltpu.CompilerParams(
            dimension_semantics=("arbitrary",),
            vmem_limit_bytes=16 * 1024 * 1024,  # explicit; well within v7x's smaller VMEM
        ),
    )(act, par)
    return out.reshape(N, SEQ, EMBED)


# ------------------------------ pure-JAX reference -----------------------------
def reference(value, key, query, p):
    n, ql, e = query.shape
    vl, kl = value.shape[1], key.shape[1]
    v = value.reshape(n, vl, HEADS, HEAD_DIM) @ p['wv'].T
    k = key.reshape(n, kl, HEADS, HEAD_DIM) @ p['wk'].T
    q = query.reshape(n, ql, HEADS, HEAD_DIM) @ p['wq'].T
    energy = jnp.einsum('nqhd,nkhd->nhqk', q, k)
    attn = jax.nn.softmax(energy / math.sqrt(float(e)), axis=3)
    ctx = jnp.einsum('nhql,nlhd->nqhd', attn, v).reshape(n, ql, e)
    attn_out = ctx @ p['wo'].T + p['bo']

    def ln(x, g, b):
        mu = x.mean(-1, keepdims=True)
        var = ((x - mu) ** 2).mean(-1, keepdims=True)
        return (x - mu) / jnp.sqrt(var + LN_EPS) * g + b

    x = ln(attn_out + query, p['g1'], p['beta1'])                 # dropout: identity (eval)
    ff = jnp.maximum(x @ p['w1'].T + p['b1'], 0.0) @ p['w2'].T + p['b2']
    return ln(ff + x, p['g2'], p['beta2'])                        # dropout: identity (eval)


# ---------------------------------- main ---------------------------------------
if __name__ == "__main__":
    key0 = jax.random.PRNGKey(0)
    ks = jax.random.split(key0, 16)

    value = jax.random.normal(ks[0], (N, SEQ, EMBED), jnp.float32)
    key_in = jax.random.normal(ks[1], (N, SEQ, EMBED), jnp.float32)
    query = jax.random.normal(ks[2], (N, SEQ, EMBED), jnp.float32)

    params = dict(
        wv=jax.random.normal(ks[3], (HEAD_DIM, HEAD_DIM), jnp.float32) * 0.1,
        wk=jax.random.normal(ks[4], (HEAD_DIM, HEAD_DIM), jnp.float32) * 0.1,
        wq=jax.random.normal(ks[5], (HEAD_DIM, HEAD_DIM), jnp.float32) * 0.1,
        wo=jax.random.normal(ks[6], (EMBED, EMBED), jnp.float32) * 0.1,
        bo=jax.random.normal(ks[7], (EMBED,), jnp.float32) * 0.1,
        g1=1.0 + jax.random.normal(ks[8], (EMBED,), jnp.float32) * 0.05,
        beta1=jax.random.normal(ks[9], (EMBED,), jnp.float32) * 0.05,
        g2=1.0 + jax.random.normal(ks[10], (EMBED,), jnp.float32) * 0.05,
        beta2=jax.random.normal(ks[11], (EMBED,), jnp.float32) * 0.05,
        w1=jax.random.normal(ks[12], (HIDDEN, EMBED), jnp.float32) * 0.1,
        b1=jax.random.normal(ks[13], (HIDDEN,), jnp.float32) * 0.1,
        w2=jax.random.normal(ks[14], (EMBED, HIDDEN), jnp.float32) * 0.1,
        b2=jax.random.normal(ks[15], (EMBED,), jnp.float32) * 0.1,
    )

    out = transformer_block(value, key_in, query, params)
    out = jax.block_until_ready(out)

    ref = reference(value, key_in, query, params)
    assert out.shape == (N, SEQ, EMBED)
    assert jnp.allclose(out, ref, atol=1e-4, rtol=1e-4), "mismatch vs reference"

    print("KERNEL_OK")
</pallas_src>

<mosaic_0001>
module attributes {stable_mosaic.version = 11 : i64} {
  func.func @transformer_block_kernel(%arg0: i32, %arg1: memref<48x32xf32, #tpu.memory_space<vmem>>, %arg2: memref<104x128xf32, #tpu.memory_space<vmem>>, %arg3: memref<16x32xf32, #tpu.memory_space<vmem>>) attributes {dimension_semantics = [#tpu.dimension_semantics<arbitrary>], iteration_bounds = array<i64: 1>, scalar_prefetch = 0 : i64, scratch_operands = 0 : i64, tpu.core_type = #tpu.core_type<tc>, window_params = [{pipeline_mode = #tpu.pipeline_mode<synchronous>, transform_indices = @transform_0, window_bounds = array<i64: 48, 32>}, {pipeline_mode = #tpu.pipeline_mode<synchronous>, transform_indices = @transform_1, window_bounds = array<i64: 104, 128>}, {pipeline_mode = #tpu.pipeline_mode<synchronous>, transform_indices = @transform_2, window_bounds = array<i64: 16, 32>}]} {
    %c0 = arith.constant 0 : index
    %c0_0 = arith.constant 0 : index
    %0 = vector.load %arg1[%c0, %c0_0] : memref<48x32xf32, #tpu.memory_space<vmem>>, vector<16x32xf32>
    %c16 = arith.constant 16 : index
    %c0_1 = arith.constant 0 : index
    %1 = vector.load %arg1[%c16, %c0_1] : memref<48x32xf32, #tpu.memory_space<vmem>>, vector<16x32xf32>
    %c32 = arith.constant 32 : index
    %c0_2 = arith.constant 0 : index
    %2 = vector.load %arg1[%c32, %c0_2] : memref<48x32xf32, #tpu.memory_space<vmem>>, vector<16x32xf32>
    %c0_3 = arith.constant 0 : index
    %c0_4 = arith.constant 0 : index
    %3 = vector.load %arg2[%c0_3, %c0_4] : memref<104x128xf32, #tpu.memory_space<vmem>>, vector<32x32xf32>
    %c0_5 = arith.constant 0 : index
    %c32_6 = arith.constant 32 : index
    %4 = vector.load %arg2[%c0_5, %c32_6] : memref<104x128xf32, #tpu.memory_space<vmem>>, vector<32x32xf32>
    %c0_7 = arith.constant 0 : index
    %c64 = arith.constant 64 : index
    %5 = vector.load %arg2[%c0_7, %c64] : memref<104x128xf32, #tpu.memory_space<vmem>>, vector<32x32xf32>
    %c0_8 = arith.constant 0 : index
    %c96 = arith.constant 96 : index
    %6 = vector.load %arg2[%c0_8, %c96] : memref<104x128xf32, #tpu.memory_space<vmem>>, vector<32x32xf32>
    %c32_9 = arith.constant 32 : index
    %c0_10 = arith.constant 0 : index
    %7 = vector.load %arg2[%c32_9, %c0_10] : memref<104x128xf32, #tpu.memory_space<vmem>>, vector<32x128xf32>
    %c64_11 = arith.constant 64 : index
    %c0_12 = arith.constant 0 : index
    %8 = vector.load %arg2[%c64_11, %c0_12] : memref<104x128xf32, #tpu.memory_space<vmem>>, vector<32x128xf32>
    %c96_13 = arith.constant 96 : index
    %c0_14 = arith.constant 0 : index
    %9 = vector.load %arg2[%c96_13, %c0_14] : memref<104x128xf32, #tpu.memory_space<vmem>>, vector<1x128xf32>
    %c97 = arith.constant 97 : index
    %c0_15 = arith.constant 0 : index
    %10 = vector.load %arg2[%c97, %c0_15] : memref<104x128xf32, #tpu.memory_space<vmem>>, vector<1x32xf32>
    %c97_16 = arith.constant 97 : index
    %c32_17 = arith.constant 32 : index
    %11 = vector.load %arg2[%c97_16, %c32_17] : memref<104x128xf32, #tpu.memory_space<vmem>>, vector<1x32xf32>
    %c97_18 = arith.constant 97 : index
    %c64_19 = arith.constant 64 : index
    %12 = vector.load %arg2[%c97_18, %c64_19] : memref<104x128xf32, #tpu.memory_space<vmem>>, vector<1x32xf32>
    %c97_20 = arith.constant 97 : index
    %c96_21 = arith.constant 96 : index
    %13 = vector.load %arg2[%c97_20, %c96_21] : memref<104x128xf32, #tpu.memory_space<vmem>>, vector<1x32xf32>
    %c98 = arith.constant 98 : index
    %c0_22 = arith.constant 0 : index
    %14 = vector.load %arg2[%c98, %c0_22] : memref<104x128xf32, #tpu.memory_space<vmem>>, vector<1x32xf32>
    %c98_23 = arith.constant 98 : index
    %c32_24 = arith.constant 32 : index
    %15 = vector.load %arg2[%c98_23, %c32_24] : memref<104x128xf32, #tpu.memory_space<vmem>>, vector<1x32xf32>
    %cst = arith.constant dense<0.000000e+00> : vector<16x32xf32>
    %16 = tpu.matmul %2, %3, %cst {dimension_numbers = #tpu.dot_dimension_numbers<[1], [0], [0], [1], [0, 0, 1, 1], [], []>} : vector<16x32xf32>, vector<32x32xf32>, vector<16x32xf32> -> vector<16x32xf32>
    %cst_25 = arith.constant dense<0.000000e+00> : vector<16x32xf32>
    %17 = tpu.matmul %1, %4, %cst_25 {dimension_numbers = #tpu.dot_dimension_numbers<[1], [0], [0], [1], [0, 0, 1, 1], [], []>} : vector<16x32xf32>, vector<32x32xf32>, vector<16x32xf32> -> vector<16x32xf32>
    %cst_26 = arith.constant dense<0.000000e+00> : vector<16x32xf32>
    %18 = tpu.matmul %0, %5, %cst_26 {dimension_numbers = #tpu.dot_dimension_numbers<[1], [0], [0], [1], [0, 0, 1, 1], [], []>} : vector<16x32xf32>, vector<32x32xf32>, vector<16x32xf32> -> vector<16x32xf32>
    %19 = vector.shape_cast %16 : vector<16x32xf32> to vector<2x8x32xf32>
    %20 = vector.shape_cast %17 : vector<16x32xf32> to vector<2x8x32xf32>
    %21 = vector.shape_cast %18 : vector<16x32xf32> to vector<2x8x32xf32>
    %22 = vector.extract_strided_slice %19 {offsets = [0, 0, 0], sizes = [2, 8, 8], strides = [1, 1, 1]} : vector<2x8x32xf32> to vector<2x8x8xf32>
    %23 = vector.extract_strided_slice %20 {offsets = [0, 0, 0], sizes = [2, 8, 8], strides = [1, 1, 1]} : vector<2x8x32xf32> to vector<2x8x8xf32>
    %24 = vector.extract_strided_slice %21 {offsets = [0, 0, 0], sizes = [2, 8, 8], strides = [1, 1, 1]} : vector<2x8x32xf32> to vector<2x8x8xf32>
    "tpu.trace_start"() <{level = 10 : i32, message = "nqd,nkd->nqk"}> : () -> ()
    %cst_27 = arith.constant dense<0.000000e+00> : vector<2x8x8xf32>
    %25 = tpu.matmul %22, %23, %cst_27 {dimension_numbers = #tpu.dot_dimension_numbers<[2], [2], [1], [1], [0, 0, 0, 1, 1, 1], [0], [0]>} : vector<2x8x8xf32>, vector<2x8x8xf32>, vector<2x8x8xf32> -> vector<2x8x8xf32>
    "tpu.trace_stop"() : () -> ()
    %cst_28 = arith.constant dense<0xFF800000> : vector<2x8xf32>
    %26 = vector.multi_reduction <maximumf>, %25, %cst_28 [2] : vector<2x8x8xf32> to vector<2x8xf32>
    %27 = vector.shape_cast %26 : vector<2x8xf32> to vector<2x8x1xf32>
    %28 = vector.broadcast %27 : vector<2x8x1xf32> to vector<2x8x8xf32>
    %29 = arith.subf %25, %28 : vector<2x8x8xf32>
    %30 = math.exp %29 : vector<2x8x8xf32>
    %cst_29 = arith.constant dense<0.000000e+00> : vector<2x8xf32>
    %31 = vector.multi_reduction <add>, %30, %cst_29 [2] : vector<2x8x8xf32> to vector<2x8xf32>
    %32 = vector.shape_cast %31 : vector<2x8xf32> to vector<2x8x1xf32>
    %33 = vector.broadcast %32 : vector<2x8x1xf32> to vector<2x8x8xf32>
    %34 = arith.divf %30, %33 : vector<2x8x8xf32>
    "tpu.trace_start"() <{level = 10 : i32, message = "nqk,nkd->nqd"}> : () -> ()
    %cst_30 = arith.constant dense<0.000000e+00> : vector<2x8x8xf32>
    %35 = tpu.matmul %34, %24, %cst_30 {dimension_numbers = #tpu.dot_dimension_numbers<[2], [1], [1], [2], [0, 0, 0, 1, 1, 2], [0], [0]>} : vector<2x8x8xf32>, vector<2x8x8xf32>, vector<2x8x8xf32> -> vector<2x8x8xf32>
    "tpu.trace_stop"() : () -> ()
    %36 = vector.extract_strided_slice %19 {offsets = [0, 0, 8], sizes = [2, 8, 8], strides = [1, 1, 1]} : vector<2x8x32xf32> to vector<2x8x8xf32>
    %37 = vector.extract_strided_slice %20 {offsets = [0, 0, 8], sizes = [2, 8, 8], strides = [1, 1, 1]} : vector<2x8x32xf32> to vector<2x8x8xf32>
    %38 = vector.extract_strided_slice %21 {offsets = [0, 0, 8], sizes = [2, 8, 8], strides = [1, 1, 1]} : vector<2x8x32xf32> to vector<2x8x8xf32>
    "tpu.trace_start"() <{level = 10 : i32, message = "nqd,nkd->nqk"}> : () -> ()
    %cst_31 = arith.constant dense<0.000000e+00> : vector<2x8x8xf32>
    %39 = tpu.matmul %36, %37, %cst_31 {dimension_numbers = #tpu.dot_dimension_numbers<[2], [2], [1], [1], [0, 0, 0, 1, 1, 1], [0], [0]>} : vector<2x8x8xf32>, vector<2x8x8xf32>, vector<2x8x8xf32> -> vector<2x8x8xf32>
    "tpu.trace_stop"() : () -> ()
    %cst_32 = arith.constant dense<0xFF800000> : vector<2x8xf32>
    %40 = vector.multi_reduction <maximumf>, %39, %cst_32 [2] : vector<2x8x8xf32> to vector<2x8xf32>
    %41 = vector.shape_cast %40 : vector<2x8xf32> to vector<2x8x1xf32>
    %42 = vector.broadcast %41 : vector<2x8x1xf32> to vector<2x8x8xf32>
    %43 = arith.subf %39, %42 : vector<2x8x8xf32>
    %44 = math.exp %43 : vector<2x8x8xf32>
    %cst_33 = arith.constant dense<0.000000e+00> : vector<2x8xf32>
    %45 = vector.multi_reduction <add>, %44, %cst_33 [2] : vector<2x8x8xf32> to vector<2x8xf32>
    %46 = vector.shape_cast %45 : vector<2x8xf32> to vector<2x8x1xf32>
    %47 = vector.broadcast %46 : vector<2x8x1xf32> to vector<2x8x8xf32>
    %48 = arith.divf %44, %47 : vector<2x8x8xf32>
    "tpu.trace_start"() <{level = 10 : i32, message = "nqk,nkd->nqd"}> : () -> ()
    %cst_34 = arith.constant dense<0.000000e+00> : vector<2x8x8xf32>
    %49 = tpu.matmul %48, %38, %cst_34 {dimension_numbers = #tpu.dot_dimension_numbers<[2], [1], [1], [2], [0, 0, 0, 1, 1, 2], [0], [0]>} : vector<2x8x8xf32>, vector<2x8x8xf32>, vector<2x8x8xf32> -> vector<2x8x8xf32>
    "tpu.trace_stop"() : () -> ()
    %50 = vector.extract_strided_slice %19 {offsets = [0, 0, 16], sizes = [2, 8, 8], strides = [1, 1, 1]} : vector<2x8x32xf32> to vector<2x8x8xf32>
    %51 = vector.extract_strided_slice %20 {offsets = [0, 0, 16], sizes = [2, 8, 8], strides = [1, 1, 1]} : vector<2x8x32xf32> to vector<2x8x8xf32>
    %52 = vector.extract_strided_slice %21 {offsets = [0, 0, 16], sizes = [2, 8, 8], strides = [1, 1, 1]} : vector<2x8x32xf32> to vector<2x8x8xf32>
    "tpu.trace_start"() <{level = 10 : i32, message = "nqd,nkd->nqk"}> : () -> ()
    %cst_35 = arith.constant dense<0.000000e+00> : vector<2x8x8xf32>
    %53 = tpu.matmul %50, %51, %cst_35 {dimension_numbers = #tpu.dot_dimension_numbers<[2], [2], [1], [1], [0, 0, 0, 1, 1, 1], [0], [0]>} : vector<2x8x8xf32>, vector<2x8x8xf32>, vector<2x8x8xf32> -> vector<2x8x8xf32>
    "tpu.trace_stop"() : () -> ()
    %cst_36 = arith.constant dense<0xFF800000> : vector<2x8xf32>
    %54 = vector.multi_reduction <maximumf>, %53, %cst_36 [2] : vector<2x8x8xf32> to vector<2x8xf32>
    %55 = vector.shape_cast %54 : vector<2x8xf32> to vector<2x8x1xf32>
    %56 = vector.broadcast %55 : vector<2x8x1xf32> to vector<2x8x8xf32>
    %57 = arith.subf %53, %56 : vector<2x8x8xf32>
    %58 = math.exp %57 : vector<2x8x8xf32>
    %cst_37 = arith.constant dense<0.000000e+00> : vector<2x8xf32>
    %59 = vector.multi_reduction <add>, %58, %cst_37 [2] : vector<2x8x8xf32> to vector<2x8xf32>
    %60 = vector.shape_cast %59 : vector<2x8xf32> to vector<2x8x1xf32>
    %61 = vector.broadcast %60 : vector<2x8x1xf32> to vector<2x8x8xf32>
    %62 = arith.divf %58, %61 : vector<2x8x8xf32>
    "tpu.trace_start"() <{level = 10 : i32, message = "nqk,nkd->nqd"}> : () -> ()
    %cst_38 = arith.constant dense<0.000000e+00> : vector<2x8x8xf32>
    %63 = tpu.matmul %62, %52, %cst_38 {dimension_numbers = #tpu.dot_dimension_numbers<[2], [1], [1], [2], [0, 0, 0, 1, 1, 2], [0], [0]>} : vector<2x8x8xf32>, vector<2x8x8xf32>, vector<2x8x8xf32> -> vector<2x8x8xf32>
    "tpu.trace_stop"() : () -> ()
    %64 = vector.extract_strided_slice %19 {offsets = [0, 0, 24], sizes = [2, 8, 8], strides = [1, 1, 1]} : vector<2x8x32xf32> to vector<2x8x8xf32>
    %65 = vector.extract_strided_slice %20 {offsets = [0, 0, 24], sizes = [2, 8, 8], strides = [1, 1, 1]} : vector<2x8x32xf32> to vector<2x8x8xf32>
    %66 = vector.extract_strided_slice %21 {offsets = [0, 0, 24], sizes = [2, 8, 8], strides = [1, 1, 1]} : vector<2x8x32xf32> to vector<2x8x8xf32>
    "tpu.trace_start"() <{level = 10 : i32, message = "nqd,nkd->nqk"}> : () -> ()
    %cst_39 = arith.constant dense<0.000000e+00> : vector<2x8x8xf32>
    %67 = tpu.matmul %64, %65, %cst_39 {dimension_numbers = #tpu.dot_dimension_numbers<[2], [2], [1], [1], [0, 0, 0, 1, 1, 1], [0], [0]>} : vector<2x8x8xf32>, vector<2x8x8xf32>, vector<2x8x8xf32> -> vector<2x8x8xf32>
    "tpu.trace_stop"() : () -> ()
    %cst_40 = arith.constant dense<0xFF800000> : vector<2x8xf32>
    %68 = vector.multi_reduction <maximumf>, %67, %cst_40 [2] : vector<2x8x8xf32> to vector<2x8xf32>
    %69 = vector.shape_cast %68 : vector<2x8xf32> to vector<2x8x1xf32>
    %70 = vector.broadcast %69 : vector<2x8x1xf32> to vector<2x8x8xf32>
    %71 = arith.subf %67, %70 : vector<2x8x8xf32>
    %72 = math.exp %71 : vector<2x8x8xf32>
    %cst_41 = arith.constant dense<0.000000e+00> : vector<2x8xf32>
    %73 = vector.multi_reduction <add>, %72, %cst_41 [2] : vector<2x8x8xf32> to vector<2x8xf32>
    %74 = vector.shape_cast %73 : vector<2x8xf32> to vector<2x8x1xf32>
    %75 = vector.broadcast %74 : vector<2x8x1xf32> to vector<2x8x8xf32>
    %76 = arith.divf %72, %75 : vector<2x8x8xf32>
    "tpu.trace_start"() <{level = 10 : i32, message = "nqk,nkd->nqd"}> : () -> ()
    %cst_42 = arith.constant dense<0.000000e+00> : vector<2x8x8xf32>
    %77 = tpu.matmul %76, %66, %cst_42 {dimension_numbers = #tpu.dot_dimension_numbers<[2], [1], [1], [2], [0, 0, 0, 1, 1, 2], [0], [0]>} : vector<2x8x8xf32>, vector<2x8x8xf32>, vector<2x8x8xf32> -> vector<2x8x8xf32>
    "tpu.trace_stop"() : () -> ()
    %78 = tpu.concatenate %35, %49, %63, %77 in 2 : vector<2x8x8xf32>, vector<2x8x8xf32>, vector<2x8x8xf32>, vector<2x8x8xf32> -> vector<2x8x32xf32>
    %79 = vector.shape_cast %78 : vector<2x8x32xf32> to vector<16x32xf32>
    %cst_43 = arith.constant dense<0.000000e+00> : vector<16x32xf32>
    %80 = tpu.matmul %79, %6, %cst_43 {dimension_numbers = #tpu.dot_dimension_numbers<[1], [0], [0], [1], [0, 0, 1, 1], [], []>} : vector<16x32xf32>, vector<32x32xf32>, vector<16x32xf32> -> vector<16x32xf32>
    %81 = vector.broadcast %10 : vector<1x32xf32> to vector<16x32xf32>
    %82 = arith.addf %80, %81 : vector<16x32xf32>
    %83 = arith.addf %82, %2 : vector<16x32xf32>
    %cst_44 = arith.constant dense<0.000000e+00> : vector<16xf32>
    %84 = vector.multi_reduction <add>, %83, %cst_44 [1] : vector<16x32xf32> to vector<16xf32>
    %85 = vector.shape_cast %84 : vector<16xf32> to vector<16x1xf32>
    %cst_45 = arith.constant 3.200000e+01 : f32
    %86 = vector.broadcast %cst_45 : f32 to vector<16x1xf32>
    %87 = arith.divf %85, %86 : vector<16x1xf32>
    %88 = vector.broadcast %87 : vector<16x1xf32> to vector<16x32xf32>
    %89 = arith.subf %83, %88 : vector<16x32xf32>
    %90 = arith.mulf %89, %89 : vector<16x32xf32>
    %cst_46 = arith.constant dense<0.000000e+00> : vector<16xf32>
    %91 = vector.multi_reduction <add>, %90, %cst_46 [1] : vector<16x32xf32> to vector<16xf32>
    %92 = vector.shape_cast %91 : vector<16xf32> to vector<16x1xf32>
    %cst_47 = arith.constant 3.200000e+01 : f32
    %93 = vector.broadcast %cst_47 : f32 to vector<16x1xf32>
    %94 = arith.divf %92, %93 : vector<16x1xf32>
    %cst_48 = arith.constant 9.99999974E-6 : f32
    %95 = vector.broadcast %cst_48 : f32 to vector<16x1xf32>
    %96 = arith.addf %94, %95 : vector<16x1xf32>
    %97 = math.rsqrt %96 : vector<16x1xf32>
    %98 = vector.broadcast %97 : vector<16x1xf32> to vector<16x32xf32>
    %99 = arith.mulf %89, %98 : vector<16x32xf32>
    %100 = vector.broadcast %11 : vector<1x32xf32> to vector<16x32xf32>
    %101 = arith.mulf %99, %100 : vector<16x32xf32>
    %102 = vector.broadcast %12 : vector<1x32xf32> to vector<16x32xf32>
    %103 = arith.addf %101, %102 : vector<16x32xf32>
    %cst_49 = arith.constant dense<0.000000e+00> : vector<16x128xf32>
    %104 = tpu.matmul %103, %7, %cst_49 {dimension_numbers = #tpu.dot_dimension_numbers<[1], [0], [0], [1], [0, 0, 1, 1], [], []>} : vector<16x32xf32>, vector<32x128xf32>, vector<16x128xf32> -> vector<16x128xf32>
    %105 = vector.broadcast %9 : vector<1x128xf32> to vector<16x128xf32>
    %106 = arith.addf %104, %105 : vector<16x128xf32>
    %cst_50 = arith.constant 0.000000e+00 : f32
    %107 = vector.broadcast %cst_50 : f32 to vector<16x128xf32>
    %108 = arith.maximumf %106, %107 : vector<16x128xf32>
    "tpu.trace_start"() <{level = 10 : i32, message = "nk,ek->ne"}> : () -> ()
    %cst_51 = arith.constant dense<0.000000e+00> : vector<16x32xf32>
    %109 = tpu.matmul %108, %8, %cst_51 {dimension_numbers = #tpu.dot_dimension_numbers<[1], [1], [0], [0], [0, 0, 1, 0], [], []>} : vector<16x128xf32>, vector<32x128xf32>, vector<16x32xf32> -> vector<16x32xf32>
    "tpu.trace_stop"() : () -> ()
    %110 = vector.broadcast %15 : vector<1x32xf32> to vector<16x32xf32>
    %111 = arith.addf %109, %110 : vector<16x32xf32>
    %112 = arith.addf %111, %103 : vector<16x32xf32>
    %cst_52 = arith.constant dense<0.000000e+00> : vector<16xf32>
    %113 = vector.multi_reduction <add>, %112, %cst_52 [1] : vector<16x32xf32> to vector<16xf32>
    %114 = vector.shape_cast %113 : vector<16xf32> to vector<16x1xf32>
    %cst_53 = arith.constant 3.200000e+01 : f32
    %115 = vector.broadcast %cst_53 : f32 to vector<16x1xf32>
    %116 = arith.divf %114, %115 : vector<16x1xf32>
    %117 = vector.broadcast %116 : vector<16x1xf32> to vector<16x32xf32>
    %118 = arith.subf %112, %117 : vector<16x32xf32>
    %119 = arith.mulf %118, %118 : vector<16x32xf32>
    %cst_54 = arith.constant dense<0.000000e+00> : vector<16xf32>
    %120 = vector.multi_reduction <add>, %119, %cst_54 [1] : vector<16x32xf32> to vector<16xf32>
    %121 = vector.shape_cast %120 : vector<16xf32> to vector<16x1xf32>
    %cst_55 = arith.constant 3.200000e+01 : f32
    %122 = vector.broadcast %cst_55 : f32 to vector<16x1xf32>
    %123 = arith.divf %121, %122 : vector<16x1xf32>
    %cst_56 = arith.constant 9.99999974E-6 : f32
    %124 = vector.broadcast %cst_56 : f32 to vector<16x1xf32>
    %125 = arith.addf %123, %124 : vector<16x1xf32>
    %126 = math.rsqrt %125 : vector<16x1xf32>
    %127 = vector.broadcast %126 : vector<16x1xf32> to vector<16x32xf32>
    %128 = arith.mulf %118, %127 : vector<16x32xf32>
    %129 = vector.broadcast %13 : vector<1x32xf32> to vector<16x32xf32>
    %130 = arith.mulf %128, %129 : vector<16x32xf32>
    %131 = vector.broadcast %14 : vector<1x32xf32> to vector<16x32xf32>
    %132 = arith.addf %130, %131 : vector<16x32xf32>
    %c0_57 = arith.constant 0 : index
    %c0_58 = arith.constant 0 : index
    %133 = vector.load %arg3[%c0_57, %c0_58] : memref<16x32xf32, #tpu.memory_space<vmem>>, vector<16x32xf32>
    tpu.vector_store %arg3[%c0_57, %c0_58], %132 {strides = array<i32>} : memref<16x32xf32, #tpu.memory_space<vmem>>, vector<16x32xf32>,
    return
  }
  func.func @transform_0(%arg0: i32) -> (i32, i32) {
    %c0_i32 = arith.constant 0 : i32
    %c0_i32_0 = arith.constant 0 : i32
    %c0_i32_1 = arith.constant 0 : i32
    return %c0_i32, %c0_i32_0 : i32, i32
  }
  func.func @transform_1(%arg0: i32) -> (i32, i32) {
    %c0_i32 = arith.constant 0 : i32
    %c0_i32_0 = arith.constant 0 : i32
    %c0_i32_1 = arith.constant 0 : i32
    return %c0_i32, %c0_i32_0 : i32, i32
  }
  func.func @transform_2(%arg0: i32) -> (i32, i32) {
    %c0_i32 = arith.constant 0 : i32
    %c0_i32_0 = arith.constant 0 : i32
    %c0_i32_1 = arith.constant 0 : i32
    return %c0_i32, %c0_i32_0 : i32, i32
  }
}

</mosaic_0001>

<llo_original>
// kernel: tpu_custom_call.1
$region0: #{tpu_custom_call.1}
  #allocation0 [shape = 'u32[]', space=smem, size = 0x4, offset = 0x4, fixed_abs, tag = 'smem constant byte address 0x4 - core index']
  #allocation1 [shape = 'u32[144,128]{1,0:T(1,128)}', space=vmem, size = 0x12000, scoped, tag = 'internal scratch']
  %s0 = inlined_call_operand.vmem [shape: f32[48,32], index: 0, kind: input, shape index: {}]
  %s1 = inlined_call_operand.hbm [shape: f32[104,128], index: 1, kind: input, shape index: {}]
  %s2 = inlined_call_operand.hbm [shape: f32[16,32], index: 2, kind: output, shape index: {}]
  %s3 = sld [smem:[#allocation0]]
  $region22: #{tpu_custom_call.1} parent=0
    _
  %s5 = ssub.s32 1, %s3
  %s6 = scalar_select 0, %s5, %s3
  $region1: #{tpu_custom_call.1} parent=0
    #allocation2 [shape = 'u8[53248]{0}', space=vmem, size = 0xd000, scoped, tag = 'input window, operand 1, single buffered']
    #allocation3 [shape = 's32[1]{0}', space=sflag, size = 0x4, scoped, tag = 'scoped memory for tpu_custom_call.1']
    #allocation4 [shape = 's32[1]{0}', space=sflag, size = 0x4, scoped, tag = 'scoped memory for tpu_custom_call.1']
    #allocation5 [shape = 'u8[8192]{0}', space=vmem, size = 0x2000, scoped, tag = 'output window, operand 0, single buffered']
    %7 = vsyncpa [#allocation3], 0
    %8 = vsyncpa [#allocation4], 0
    // Predicated region
    $region2: #{tpu_custom_call.1} parent=1 // pred_check
      _
    $region3: #{tpu_custom_call.1} parent=1 // pred_check_branch
      %10 = sbr.rel (0) target = $region5
    $region4: #{tpu_custom_call.1} parent=1 // pred_region
      _
    $region5: #{tpu_custom_call.1} parent=1 // pred_fallthru
      _
    // Predicated region
    $region6: #{tpu_custom_call.1} parent=1 // pred_check
      _
    $region7: #{tpu_custom_call.1} parent=1 // pred_check_branch
      %12 = sbr.rel (0) target = $region9
    $region8: #{tpu_custom_call.1} parent=1 // pred_region
      %s14 = ssub.s32 1664, 1664
      %15 = vsyncadd [#allocation3], %s14
      %s16 = sshll.u32 [#allocation2], 4
      %s17 = int_to_ptr.vmem [resolvable:$true] %s16
      %22 = dma.hbm_to_vmem [thread:$0]  %s1, 1664, %s17, [#allocation3], 128, 128, 8
    $region9: #{tpu_custom_call.1} parent=1 // pred_fallthru
      _
    // Predicated region
    $region10: #{tpu_custom_call.1} parent=1 // pred_check
      _
    $region11: #{tpu_custom_call.1} parent=1 // pred_check_branch
      %24 = sbr.rel (0) target = $region13
    $region12: #{tpu_custom_call.1} parent=1 // pred_region
      %25 = dma.done [#allocation3], 1664
    $region13: #{tpu_custom_call.1} parent=1 // pred_fallthru
      _
    %v26 = vld [vmem:[%s0] sm:$0xff]
    %v27 = vld [vmem:[%s0 + $0x8] sm:$0xff]
    %v28 = vld [vmem:[%s0 + $0x10] sm:$0xff]
    %v29 = vld [vmem:[%s0 + $0x18] sm:$0xff]
    %v30 = vld [vmem:[%s0 + $0x20] sm:$0xff]
    %v31 = vld [vmem:[%s0 + $0x28] sm:$0xff]
    %v32 = vld [vmem:[#allocation2] sm:$0xff]
    %v33 = vld [vmem:[#allocation2 + $0x8] sm:$0xff]
    %v34 = vld [vmem:[#allocation2 + $0x10] sm:$0xff]
    %v35 = vld [vmem:[#allocation2 + $0x18] sm:$0xff]
    %v36 = vld [vmem:[#allocation2 + $0x20] sm:$0xff]
    %v37 = vld [vmem:[#allocation2 + $0x28] sm:$0xff]
    %v38 = vld [vmem:[#allocation2 + $0x30] sm:$0xff]
    %v39 = vld [vmem:[#allocation2 + $0x38] sm:$0xff]
    %v40 = vld [vmem:[#allocation2 + $0x40] sm:$0xff]
    %v41 = vld [vmem:[#allocation2 + $0x48] sm:$0xff]
    %v42 = vld [vmem:[#allocation2 + $0x50] sm:$0xff]
    %v43 = vld [vmem:[#allocation2 + $0x58] sm:$0xff]
    %v44 = vld [vmem:[#allocation2 + $0x60] sm:$0x1]
    %v45 = vld [vmem:[#allocation2 + $0x61] sm:$0x1]
    %v46 = vld [vmem:[#allocation2 + $0x62] sm:$0x1]
    %vm47 = vcmask 261120
    %v49 = vsel %vm47, %v30, 0
    %v52 = vsel %vm47, %v31, 0
    %54 = vmatprep.subr.mxu0 0.0
    %55 = vmatpush1.msra.mxu0 0.0
    %56 = vmatprep.subr.mxu0 0.0
    %57 = vmatpush1.msra.mxu0 0.0
    %58 = vmatprep.subr.mxu0 0.0
    %59 = vmatpush1.msra.mxu0 0.0
    %60 = vmatprep.subr.mxu0 0.0
    %61 = vmatpush1.msra.mxu0 0.0
    %62 = vmatprep.subr.mxu0 0.0
    %63 = vmatpush1.msra.mxu0 0.0
    %64 = vmatprep.subr.mxu0 0.0
    %65 = vmatpush1.msra.mxu0 0.0
    %66 = vmatprep.subr.mxu0 0.0
    %67 = vmatpush1.msra.mxu0 0.0
    %68 = vmatprep.subr.mxu0 0.0
    %69 = vmatpush1.msra.mxu0 0.0
    %70 = vmatprep.subr.mxu0 0.0
    %71 = vmatpush1.msra.mxu0 0.0
    %72 = vmatprep.subr.mxu0 0.0
    %73 = vmatpush1.msra.mxu0 0.0
    %74 = vmatprep.subr.mxu0 0.0
    %75 = vmatpush1.msra.mxu0 0.0
    %76 = vmatprep.subr.mxu0 0.0
    %77 = vmatpush1.msra.mxu0 0.0
    %78 = vmatprep.subr.mxu0 0.0
    %79 = vmatpush1.msra.mxu0 %v35
    %80 = vmatprep.subr.mxu0 0.0
    %81 = vmatpush1.msra.mxu0 %v34
    %82 = vmatprep.subr.mxu0 0.0
    %83 = vmatpush1.msra.mxu0 %v33
    %84 = vmatprep.subr.mxu0 0.0
    %85 = vmatpush1.msra.mxu0 %v32
    %86 = vmatprep.subr.mxu0 0.0
    %87 = vmatpush2.msra.mxu0 0.0
    %88 = vmatprep.subr.mxu0 0.0
    %89 = vmatpush2.msra.mxu0 0.0
    %90 = vmatprep.subr.mxu0 0.0
    %91 = vmatpush2.msra.mxu0 0.0
    %92 = vmatprep.subr.mxu0 0.0
    %93 = vmatpush2.msra.mxu0 0.0
    %94 = vmatprep.subr.mxu0 0.0
    %95 = vmatpush2.msra.mxu0 0.0
    %96 = vmatprep.subr.mxu0 0.0
    %97 = vmatpush2.msra.mxu0 0.0
    %98 = vmatprep.subr.mxu0 0.0
    %99 = vmatpush2.msra.mxu0 0.0
    %100 = vmatprep.subr.mxu0 0.0
    %101 = vmatpush2.msra.mxu0 0.0
    %102 = vmatprep.subr.mxu0 0.0
    %103 = vmatpush2.msra.mxu0 0.0
    %104 = vmatprep.subr.mxu0 0.0
    %105 = vmatpush2.msra.mxu0 0.0
    %106 = vmatprep.subr.mxu0 0.0
    %107 = vmatpush2.msra.mxu0 0.0
    %108 = vmatprep.subr.mxu0 0.0
    %109 = vmatpush2.msra.mxu0 0.0
    %110 = vmatprep.subr.mxu0 0.0
    %111 = vmatpush2.msra.mxu0 0.0
    %112 = vmatprep.subr.mxu0 0.0
    %113 = vmatpush2.msra.mxu0 0.0
    %114 = vmatprep.subr.mxu0 0.0
    %115 = vmatpush2.msra.mxu0 0.0
    %116 = vmatprep.subr.mxu0 0.0
    %117 = vmatpush2.msra.mxu0 0.0
    %118 = vmatprep.mubr.f32.mxu0 0.0
    %119 = vmatmul.mubr.f32.gmra.mxu0 %v49
    %v120 = vpop.f32.mrf.mxu0
    %v121 = vadd.f32 0.0, %v120
    %v122 = vpop.f32.mrf.mxu0
    %123 = vmatprep.mubr.f32.mxu0 0.0
    %124 = vmatmul.mubr.f32.gmra.mxu0 %v52
    %v125 = vpop.f32.mrf.mxu0
    %v126 = vadd.f32 0.0, %v125
    %v127 = vpop.f32.mrf.mxu0
    %128 = vdwg.mxu0
    %133 = vrot.lane.b32.xlu0 %v32, 96
    %v134 = vpop.permute.xlu0 %133
    %135 = vrot.lane.b32.xlu0 %v33, 96
    %v136 = vpop.permute.xlu0 %135
    %137 = vrot.lane.b32.xlu0 %v34, 96
    %v138 = vpop.permute.xlu0 %137
    %139 = vrot.lane.b32.xlu0 %v35, 96
    %v140 = vpop.permute.xlu0 %139
    %v146 = vsel %vm47, %v28, 0
    %v149 = vsel %vm47, %v29, 0
    %151 = vmatprep.subr.mxu0 0.0
    %152 = vmatpush1.msra.mxu0 0.0
    %153 = vmatprep.subr.mxu0 0.0
    %154 = vmatpush1.msra.mxu0 0.0
    %155 = vmatprep.subr.mxu0 0.0
    %156 = vmatpush1.msra.mxu0 0.0
    %157 = vmatprep.subr.mxu0 0.0
    %158 = vmatpush1.msra.mxu0 0.0
    %159 = vmatprep.subr.mxu0 0.0
    %160 = vmatpush1.msra.mxu0 0.0
    %161 = vmatprep.subr.mxu0 0.0
    %162 = vmatpush1.msra.mxu0 0.0
    %163 = vmatprep.subr.mxu0 0.0
    %164 = vmatpush1.msra.mxu0 0.0
    %165 = vmatprep.subr.mxu0 0.0
    %166 = vmatpush1.msra.mxu0 0.0
    %167 = vmatprep.subr.mxu0 0.0
    %168 = vmatpush1.msra.mxu0 0.0
    %169 = vmatprep.subr.mxu0 0.0
    %170 = vmatpush1.msra.mxu0 0.0
    %171 = vmatprep.subr.mxu0 0.0
    %172 = vmatpush1.msra.mxu0 0.0
    %173 = vmatprep.subr.mxu0 0.0
    %174 = vmatpush1.msra.mxu0 0.0
    %175 = vmatprep.subr.mxu0 0.0
    %176 = vmatpush1.msra.mxu0 %v140
    %177 = vmatprep.subr.mxu0 0.0
    %178 = vmatpush1.msra.mxu0 %v138
    %179 = vmatprep.subr.mxu0 0.0
    %180 = vmatpush1.msra.mxu0 %v136
    %181 = vmatprep.subr.mxu0 0.0
    %182 = vmatpush1.msra.mxu0 %v134
    %183 = vmatprep.subr.mxu0 0.0
    %184 = vmatpush2.msra.mxu0 0.0
    %185 = vmatprep.subr.mxu0 0.0
    %186 = vmatpush2.msra.mxu0 0.0
    %187 = vmatprep.subr.mxu0 0.0
    %188 = vmatpush2.msra.mxu0 0.0
    %189 = vmatprep.subr.mxu0 0.0
    %190 = vmatpush2.msra.mxu0 0.0
    %191 = vmatprep.subr.mxu0 0.0
    %192 = vmatpush2.msra.mxu0 0.0
    %193 = vmatprep.subr.mxu0 0.0
    %194 = vmatpush2.msra.mxu0 0.0
    %195 = vmatprep.subr.mxu0 0.0
    %196 = vmatpush2.msra.mxu0 0.0
    %197 = vmatprep.subr.mxu0 0.0
    %198 = vmatpush2.msra.mxu0 0.0
    %199 = vmatprep.subr.mxu0 0.0
    %200 = vmatpush2.msra.mxu0 0.0
    %201 = vmatprep.subr.mxu0 0.0
    %202 = vmatpush2.msra.mxu0 0.0
    %203 = vmatprep.subr.mxu0 0.0
    %204 = vmatpush2.msra.mxu0 0.0
    %205 = vmatprep.subr.mxu0 0.0
    %206 = vmatpush2.msra.mxu0 0.0
    %207 = vmatprep.subr.mxu0 0.0
    %208 = vmatpush2.msra.mxu0 0.0
    %209 = vmatprep.subr.mxu0 0.0
    %210 = vmatpush2.msra.mxu0 0.0
    %211 = vmatprep.subr.mxu0 0.0
    %212 = vmatpush2.msra.mxu0 0.0
    %213 = vmatprep.subr.mxu0 0.0
    %214 = vmatpush2.msra.mxu0 0.0
    %215 = vmatprep.mubr.f32.mxu0 0.0
    %216 = vmatmul.mubr.f32.gmra.mxu0 %v146
    %v217 = vpop.f32.mrf.mxu0
    %v218 = vadd.f32 0.0, %v217
    %v219 = vpop.f32.mrf.mxu0
    %220 = vmatprep.mubr.f32.mxu0 0.0
    %221 = vmatmul.mubr.f32.gmra.mxu0 %v149
    %v222 = vpop.f32.mrf.mxu0
    %v223 = vadd.f32 0.0, %v222
    %v224 = vpop.f32.mrf.mxu0
    %225 = vdwg.mxu0
    %226 = vrot.lane.b32.xlu0 %v32, 64
    %v227 = vpop.permute.xlu0 %226
    %228 = vrot.lane.b32.xlu0 %v33, 64
    %v229 = vpop.permute.xlu0 %228
    %230 = vrot.lane.b32.xlu0 %v34, 64
    %v231 = vpop.permute.xlu0 %230
    %232 = vrot.lane.b32.xlu0 %v35, 64
    %v233 = vpop.permute.xlu0 %232
    %v239 = vsel %vm47, %v26, 0
    %v242 = vsel %vm47, %v27, 0
    %244 = vmatprep.subr.mxu0 0.0
    %245 = vmatpush1.msra.mxu0 0.0
    %246 = vmatprep.subr.mxu0 0.0
    %247 = vmatpush1.msra.mxu0 0.0
    %248 = vmatprep.subr.mxu0 0.0
    %249 = vmatpush1.msra.mxu0 0.0
    %250 = vmatprep.subr.mxu0 0.0
    %251 = vmatpush1.msra.mxu0 0.0
    %252 = vmatprep.subr.mxu0 0.0
    %253 = vmatpush1.msra.mxu0 0.0
    %254 = vmatprep.subr.mxu0 0.0
    %255 = vmatpush1.msra.mxu0 0.0
    %256 = vmatprep.subr.mxu0 0.0
    %257 = vmatpush1.msra.mxu0 0.0
    %258 = vmatprep.subr.mxu0 0.0
    %259 = vmatpush1.msra.mxu0 0.0
    %260 = vmatprep.subr.mxu0 0.0
    %261 = vmatpush1.msra.mxu0 0.0
    %262 = vmatprep.subr.mxu0 0.0
    %263 = vmatpush1.msra.mxu0 0.0
    %264 = vmatprep.subr.mxu0 0.0
    %265 = vmatpush1.msra.mxu0 0.0
    %266 = vmatprep.subr.mxu0 0.0
    %267 = vmatpush1.msra.mxu0 0.0
    %268 = vmatprep.subr.mxu0 0.0
    %269 = vmatpush1.msra.mxu0 %v233
    %270 = vmatprep.subr.mxu0 0.0
    %271 = vmatpush1.msra.mxu0 %v231
    %272 = vmatprep.subr.mxu0 0.0
    %273 = vmatpush1.msra.mxu0 %v229
    %274 = vmatprep.subr.mxu0 0.0
    %275 = vmatpush1.msra.mxu0 %v227
    %276 = vmatprep.subr.mxu0 0.0
    %277 = vmatpush2.msra.mxu0 0.0
    %278 = vmatprep.subr.mxu0 0.0
    %279 = vmatpush2.msra.mxu0 0.0
    %280 = vmatprep.subr.mxu0 0.0
    %281 = vmatpush2.msra.mxu0 0.0
    %282 = vmatprep.subr.mxu0 0.0
    %283 = vmatpush2.msra.mxu0 0.0
    %284 = vmatprep.subr.mxu0 0.0
    %285 = vmatpush2.msra.mxu0 0.0
    %286 = vmatprep.subr.mxu0 0.0
    %287 = vmatpush2.msra.mxu0 0.0
    %288 = vmatprep.subr.mxu0 0.0
    %289 = vmatpush2.msra.mxu0 0.0
    %290 = vmatprep.subr.mxu0 0.0
    %291 = vmatpush2.msra.mxu0 0.0
    %292 = vmatprep.subr.mxu0 0.0
    %293 = vmatpush2.msra.mxu0 0.0
    %294 = vmatprep.subr.mxu0 0.0
    %295 = vmatpush2.msra.mxu0 0.0
    %296 = vmatprep.subr.mxu0 0.0
    %297 = vmatpush2.msra.mxu0 0.0
    %298 = vmatprep.subr.mxu0 0.0
    %299 = vmatpush2.msra.mxu0 0.0
    %300 = vmatprep.subr.mxu0 0.0
    %301 = vmatpush2.msra.mxu0 0.0
    %302 = vmatprep.subr.mxu0 0.0
    %303 = vmatpush2.msra.mxu0 0.0
    %304 = vmatprep.subr.mxu0 0.0
    %305 = vmatpush2.msra.mxu0 0.0
    %306 = vmatprep.subr.mxu0 0.0
    %307 = vmatpush2.msra.mxu0 0.0
    %308 = vmatprep.mubr.f32.mxu0 0.0
    %309 = vmatmul.mubr.f32.gmra.mxu0 %v239
    %v310 = vpop.f32.mrf.mxu0
    %v311 = vadd.f32 0.0, %v310
    %v312 = vpop.f32.mrf.mxu0
    %313 = vmatprep.mubr.f32.mxu0 0.0
    %314 = vmatmul.mubr.f32.gmra.mxu0 %v242
    %v315 = vpop.f32.mrf.mxu0
    %v316 = vadd.f32 0.0, %v315
    %v317 = vpop.f32.mrf.mxu0
    %318 = vdwg.mxu0
    %vm319 = vcmask 64512
    %v321 = vsel %vm319, %v121, 0
    %v324 = vsel %vm319, %v218, 0
    %326 = vmatprep.subr.mxu0 0.0
    %327 = vmatpush1.xpose.msra.mxu0 0.0
    %328 = vmatprep.subr.mxu0 0.0
    %329 = vmatpush1.xpose.msra.mxu0 0.0
    %330 = vmatprep.subr.mxu0 0.0
    %331 = vmatpush1.xpose.msra.mxu0 0.0
    %332 = vmatprep.subr.mxu0 0.0
    %333 = vmatpush1.xpose.msra.mxu0 0.0
    %334 = vmatprep.subr.mxu0 0.0
    %335 = vmatpush1.xpose.msra.mxu0 0.0
    %336 = vmatprep.subr.mxu0 0.0
    %337 = vmatpush1.xpose.msra.mxu0 0.0
    %338 = vmatprep.subr.mxu0 0.0
    %339 = vmatpush1.xpose.msra.mxu0 0.0
    %340 = vmatprep.subr.mxu0 0.0
    %341 = vmatpush1.xpose.msra.mxu0 0.0
    %342 = vmatprep.subr.mxu0 0.0
    %343 = vmatpush1.xpose.msra.mxu0 0.0
    %344 = vmatprep.subr.mxu0 0.0
    %345 = vmatpush1.xpose.msra.mxu0 0.0
    %346 = vmatprep.subr.mxu0 0.0
    %347 = vmatpush1.xpose.msra.mxu0 0.0
    %348 = vmatprep.subr.mxu0 0.0
    %349 = vmatpush1.xpose.msra.mxu0 0.0
    %350 = vmatprep.subr.mxu0 0.0
    %351 = vmatpush1.xpose.msra.mxu0 0.0
    %352 = vmatprep.subr.mxu0 0.0
    %353 = vmatpush1.xpose.msra.mxu0 0.0
    %354 = vmatprep.subr.mxu0 0.0
    %355 = vmatpush1.xpose.msra.mxu0 0.0
    %356 = vmatprep.subr.mxu0 0.0
    %357 = vmatpush1.xpose.msra.mxu0 %v324
    %358 = vmatprep.subr.mxu0 0.0
    %359 = vmatpush2.xpose.msra.mxu0 0.0
    %360 = vmatprep.subr.mxu0 0.0
    %361 = vmatpush2.xpose.msra.mxu0 0.0
    %362 = vmatprep.subr.mxu0 0.0
    %363 = vmatpush2.xpose.msra.mxu0 0.0
    %364 = vmatprep.subr.mxu0 0.0
    %365 = vmatpush2.xpose.msra.mxu0 0.0
    %366 = vmatprep.subr.mxu0 0.0
    %367 = vmatpush2.xpose.msra.mxu0 0.0
    %368 = vmatprep.subr.mxu0 0.0
    %369 = vmatpush2.xpose.msra.mxu0 0.0
    %370 = vmatprep.subr.mxu0 0.0
    %371 = vmatpush2.xpose.msra.mxu0 0.0
    %372 = vmatprep.subr.mxu0 0.0
    %373 = vmatpush2.xpose.msra.mxu0 0.0
    %374 = vmatprep.subr.mxu0 0.0
    %375 = vmatpush2.xpose.msra.mxu0 0.0
    %376 = vmatprep.subr.mxu0 0.0
    %377 = vmatpush2.xpose.msra.mxu0 0.0
    %378 = vmatprep.subr.mxu0 0.0
    %379 = vmatpush2.xpose.msra.mxu0 0.0
    %380 = vmatprep.subr.mxu0 0.0
    %381 = vmatpush2.xpose.msra.mxu0 0.0
    %382 = vmatprep.subr.mxu0 0.0
    %383 = vmatpush2.xpose.msra.mxu0 0.0
    %384 = vmatprep.subr.mxu0 0.0
    %385 = vmatpush2.xpose.msra.mxu0 0.0
    %386 = vmatprep.subr.mxu0 0.0
    %387 = vmatpush2.xpose.msra.mxu0 0.0
    %388 = vmatprep.subr.mxu0 0.0
    %389 = vmatpush2.xpose.msra.mxu0 0.0
    %390 = vmatprep.mubr.f32.mxu0 0.0
    %391 = vmatmul.mubr.f32.gmra.mxu0 %v321
    %v392 = vpop.f32.mrf.mxu0
    %v393 = vadd.f32 0.0, %v392
    %v394 = vpop.f32.mrf.mxu0
    %395 = vdwg.mxu0
    %v397 = vsel %vm319, %v126, 0
    %v400 = vsel %vm319, %v223, 0
    %402 = vmatprep.subr.mxu0 0.0
    %403 = vmatpush1.xpose.msra.mxu0 0.0
    %404 = vmatprep.subr.mxu0 0.0
    %405 = vmatpush1.xpose.msra.mxu0 0.0
    %406 = vmatprep.subr.mxu0 0.0
    %407 = vmatpush1.xpose.msra.mxu0 0.0
    %408 = vmatprep.subr.mxu0 0.0
    %409 = vmatpush1.xpose.msra.mxu0 0.0
    %410 = vmatprep.subr.mxu0 0.0
    %411 = vmatpush1.xpose.msra.mxu0 0.0
    %412 = vmatprep.subr.mxu0 0.0
    %413 = vmatpush1.xpose.msra.mxu0 0.0
    %414 = vmatprep.subr.mxu0 0.0
    %415 = vmatpush1.xpose.msra.mxu0 0.0
    %416 = vmatprep.subr.mxu0 0.0
    %417 = vmatpush1.xpose.msra.mxu0 0.0
    %418 = vmatprep.subr.mxu0 0.0
    %419 = vmatpush1.xpose.msra.mxu0 0.0
    %420 = vmatprep.subr.mxu0 0.0
    %421 = vmatpush1.xpose.msra.mxu0 0.0
    %422 = vmatprep.subr.mxu0 0.0
    %423 = vmatpush1.xpose.msra.mxu0 0.0
    %424 = vmatprep.subr.mxu0 0.0
    %425 = vmatpush1.xpose.msra.mxu0 0.0
    %426 = vmatprep.subr.mxu0 0.0
    %427 = vmatpush1.xpose.msra.mxu0 0.0
    %428 = vmatprep.subr.mxu0 0.0
    %429 = vmatpush1.xpose.msra.mxu0 0.0
    %430 = vmatprep.subr.mxu0 0.0
    %431 = vmatpush1.xpose.msra.mxu0 0.0
    %432 = vmatprep.subr.mxu0 0.0
    %433 = vmatpush1.xpose.msra.mxu0 %v400
    %434 = vmatprep.subr.mxu0 0.0
    %435 = vmatpush2.xpose.msra.mxu0 0.0
    %436 = vmatprep.subr.mxu0 0.0
    %437 = vmatpush2.xpose.msra.mxu0 0.0
    %438 = vmatprep.subr.mxu0 0.0
    %439 = vmatpush2.xpose.msra.mxu0 0.0
    %440 = vmatprep.subr.mxu0 0.0
    %441 = vmatpush2.xpose.msra.mxu0 0.0
    %442 = vmatprep.subr.mxu0 0.0
    %443 = vmatpush2.xpose.msra.mxu0 0.0
    %444 = vmatprep.subr.mxu0 0.0
    %445 = vmatpush2.xpose.msra.mxu0 0.0
    %446 = vmatprep.subr.mxu0 0.0
    %447 = vmatpush2.xpose.msra.mxu0 0.0
    %448 = vmatprep.subr.mxu0 0.0
    %449 = vmatpush2.xpose.msra.mxu0 0.0
    %450 = vmatprep.subr.mxu0 0.0
    %451 = vmatpush2.xpose.msra.mxu0 0.0
    %452 = vmatprep.subr.mxu0 0.0
    %453 = vmatpush2.xpose.msra.mxu0 0.0
    %454 = vmatprep.subr.mxu0 0.0
    %455 = vmatpush2.xpose.msra.mxu0 0.0
    %456 = vmatprep.subr.mxu0 0.0
    %457 = vmatpush2.xpose.msra.mxu0 0.0
    %458 = vmatprep.subr.mxu0 0.0
    %459 = vmatpush2.xpose.msra.mxu0 0.0
    %460 = vmatprep.subr.mxu0 0.0
    %461 = vmatpush2.xpose.msra.mxu0 0.0
    %462 = vmatprep.subr.mxu0 0.0
    %463 = vmatpush2.xpose.msra.mxu0 0.0
    %464 = vmatprep.subr.mxu0 0.0
    %465 = vmatpush2.xpose.msra.mxu0 0.0
    %466 = vmatprep.mubr.f32.mxu0 0.0
    %467 = vmatmul.mubr.f32.gmra.mxu0 %v397
    %v468 = vpop.f32.mrf.mxu0
    %v469 = vadd.f32 0.0, %v468
    %v470 = vpop.f32.mrf.mxu0
    %471 = vdwg.mxu0
    %v472 = vsel %vm319, %v393, -inf
    %473 = vmax.xlane.f32.xlu0 %v472
    %v474 = vpop.xlane.xlu0 %473
    %v475 = vsel %vm319, %v469, -inf
    %476 = vmax.xlane.f32.xlu0 %v475
    %v477 = vpop.xlane.xlu0 %476
    %v478 = vsub.f32 %v393, %v474
    %v479 = vsub.f32 %v469, %v477
    %v480 = vmul.f32 %v478, 1.442695
    %v481 = vpow.pop %v480
    %v482 = vmul.f32 %v479, 1.442695
    %v483 = vpow.pop %v482
    %v484 = vsel %vm319, %v481, 0.0
    %485 = vadd.xlane.f32.xlu0 %v484
    %v486 = vpop.xlane.xlu0 %485
    %v487 = vsel %vm319, %v483, 0.0
    %488 = vadd.xlane.f32.xlu0 %v487
    %v489 = vpop.xlane.xlu0 %488
    %v490 = vrcp.pop %v486
    %v491 = vmul.f32 %v481, %v490
    %v492 = vrcp.pop %v489
    %v493 = vmul.f32 %v483, %v492
    %v495 = vsel %vm319, %v491, 0
    %497 = vmatprep.subr.mxu0 0.0
    %498 = vmatpush1.msra.mxu0 0.0
    %499 = vmatprep.subr.mxu0 0.0
    %500 = vmatpush1.msra.mxu0 0.0
    %501 = vmatprep.subr.mxu0 0.0
    %502 = vmatpush1.msra.mxu0 0.0
    %503 = vmatprep.subr.mxu0 0.0
    %504 = vmatpush1.msra.mxu0 0.0
    %505 = vmatprep.subr.mxu0 0.0
    %506 = vmatpush1.msra.mxu0 0.0
    %507 = vmatprep.subr.mxu0 0.0
    %508 = vmatpush1.msra.mxu0 0.0
    %509 = vmatprep.subr.mxu0 0.0
    %510 = vmatpush1.msra.mxu0 0.0
    %511 = vmatprep.subr.mxu0 0.0
    %512 = vmatpush1.msra.mxu0 0.0
    %513 = vmatprep.subr.mxu0 0.0
    %514 = vmatpush1.msra.mxu0 0.0
    %515 = vmatprep.subr.mxu0 0.0
    %516 = vmatpush1.msra.mxu0 0.0
    %517 = vmatprep.subr.mxu0 0.0
    %518 = vmatpush1.msra.mxu0 0.0
    %519 = vmatprep.subr.mxu0 0.0
    %520 = vmatpush1.msra.mxu0 0.0
    %521 = vmatprep.subr.mxu0 0.0
    %522 = vmatpush1.msra.mxu0 0.0
    %523 = vmatprep.subr.mxu0 0.0
    %524 = vmatpush1.msra.mxu0 0.0
    %525 = vmatprep.subr.mxu0 0.0
    %526 = vmatpush1.msra.mxu0 0.0
    %527 = vmatprep.subr.mxu0 0.0
    %528 = vmatpush1.msra.mxu0 %v311
    %529 = vmatprep.subr.mxu0 0.0
    %530 = vmatpush2.msra.mxu0 0.0
    %531 = vmatprep.subr.mxu0 0.0
    %532 = vmatpush2.msra.mxu0 0.0
    %533 = vmatprep.subr.mxu0 0.0
    %534 = vmatpush2.msra.mxu0 0.0
    %535 = vmatprep.subr.mxu0 0.0
    %536 = vmatpush2.msra.mxu0 0.0
    %537 = vmatprep.subr.mxu0 0.0
    %538 = vmatpush2.msra.mxu0 0.0
    %539 = vmatprep.subr.mxu0 0.0
    %540 = vmatpush2.msra.mxu0 0.0
    %541 = vmatprep.subr.mxu0 0.0
    %542 = vmatpush2.msra.mxu0 0.0
    %543 = vmatprep.subr.mxu0 0.0
    %544 = vmatpush2.msra.mxu0 0.0
    %545 = vmatprep.subr.mxu0 0.0
    %546 = vmatpush2.msra.mxu0 0.0
    %547 = vmatprep.subr.mxu0 0.0
    %548 = vmatpush2.msra.mxu0 0.0
    %549 = vmatprep.subr.mxu0 0.0
    %550 = vmatpush2.msra.mxu0 0.0
    %551 = vmatprep.subr.mxu0 0.0
    %552 = vmatpush2.msra.mxu0 0.0
    %553 = vmatprep.subr.mxu0 0.0
    %554 = vmatpush2.msra.mxu0 0.0
    %555 = vmatprep.subr.mxu0 0.0
    %556 = vmatpush2.msra.mxu0 0.0
    %557 = vmatprep.subr.mxu0 0.0
    %558 = vmatpush2.msra.mxu0 0.0
    %559 = vmatprep.subr.mxu0 0.0
    %560 = vmatpush2.msra.mxu0 0.0
    %561 = vmatprep.mubr.f32.mxu0 0.0
    %562 = vmatmul.mubr.f32.gmra.mxu0 %v495
    %v563 = vpop.f32.mrf.mxu0
    %v564 = vadd.f32 0.0, %v563
    %v565 = vpop.f32.mrf.mxu0
    %566 = vdwg.mxu0
    %v568 = vsel %vm319, %v493, 0
    %570 = vmatprep.subr.mxu0 0.0
    %571 = vmatpush1.msra.mxu0 0.0
    %572 = vmatprep.subr.mxu0 0.0
    %573 = vmatpush1.msra.mxu0 0.0
    %574 = vmatprep.subr.mxu0 0.0
    %575 = vmatpush1.msra.mxu0 0.0
    %576 = vmatprep.subr.mxu0 0.0
    %577 = vmatpush1.msra.mxu0 0.0
    %578 = vmatprep.subr.mxu0 0.0
    %579 = vmatpush1.msra.mxu0 0.0
    %580 = vmatprep.subr.mxu0 0.0
    %581 = vmatpush1.msra.mxu0 0.0
    %582 = vmatprep.subr.mxu0 0.0
    %583 = vmatpush1.msra.mxu0 0.0
    %584 = vmatprep.subr.mxu0 0.0
    %585 = vmatpush1.msra.mxu0 0.0
    %586 = vmatprep.subr.mxu0 0.0
    %587 = vmatpush1.msra.mxu0 0.0
    %588 = vmatprep.subr.mxu0 0.0
    %589 = vmatpush1.msra.mxu0 0.0
    %590 = vmatprep.subr.mxu0 0.0
    %591 = vmatpush1.msra.mxu0 0.0
    %592 = vmatprep.subr.mxu0 0.0
    %593 = vmatpush1.msra.mxu0 0.0
    %594 = vmatprep.subr.mxu0 0.0
    %595 = vmatpush1.msra.mxu0 0.0
    %596 = vmatprep.subr.mxu0 0.0
    %597 = vmatpush1.msra.mxu0 0.0
    %598 = vmatprep.subr.mxu0 0.0
    %599 = vmatpush1.msra.mxu0 0.0
    %600 = vmatprep.subr.mxu0 0.0
    %601 = vmatpush1.msra.mxu0 %v316
    %602 = vmatprep.subr.mxu0 0.0
    %603 = vmatpush2.msra.mxu0 0.0
    %604 = vmatprep.subr.mxu0 0.0
    %605 = vmatpush2.msra.mxu0 0.0
    %606 = vmatprep.subr.mxu0 0.0
    %607 = vmatpush2.msra.mxu0 0.0
    %608 = vmatprep.subr.mxu0 0.0
    %609 = vmatpush2.msra.mxu0 0.0
    %610 = vmatprep.subr.mxu0 0.0
    %611 = vmatpush2.msra.mxu0 0.0
    %612 = vmatprep.subr.mxu0 0.0
    %613 = vmatpush2.msra.mxu0 0.0
    %614 = vmatprep.subr.mxu0 0.0
    %615 = vmatpush2.msra.mxu0 0.0
    %616 = vmatprep.subr.mxu0 0.0
    %617 = vmatpush2.msra.mxu0 0.0
    %618 = vmatprep.subr.mxu0 0.0
    %619 = vmatpush2.msra.mxu0 0.0
    %620 = vmatprep.subr.mxu0 0.0
    %621 = vmatpush2.msra.mxu0 0.0
    %622 = vmatprep.subr.mxu0 0.0
    %623 = vmatpush2.msra.mxu0 0.0
    %624 = vmatprep.subr.mxu0 0.0
    %625 = vmatpush2.msra.mxu0 0.0
    %626 = vmatprep.subr.mxu0 0.0
    %627 = vmatpush2.msra.mxu0 0.0
    %628 = vmatprep.subr.mxu0 0.0
    %629 = vmatpush2.msra.mxu0 0.0
    %630 = vmatprep.subr.mxu0 0.0
    %631 = vmatpush2.msra.mxu0 0.0
    %632 = vmatprep.subr.mxu0 0.0
    %633 = vmatpush2.msra.mxu0 0.0
    %634 = vmatprep.mubr.f32.mxu0 0.0
    %635 = vmatmul.mubr.f32.gmra.mxu0 %v568
    %v636 = vpop.f32.mrf.mxu0
    %v637 = vadd.f32 0.0, %v636
    %v638 = vpop.f32.mrf.mxu0
    %639 = vdwg.mxu0
    %640 = vrot.lane.b32.xlu0 %v121, 120
    %v641 = vpop.permute.xlu0 %640
    %642 = vrot.lane.b32.xlu0 %v218, 120
    %v643 = vpop.permute.xlu0 %642
    %v644 = vsel %vm319, %v641, 0
    %v646 = vsel %vm319, %v643, 0
    %648 = vmatprep.subr.mxu0 0.0
    %649 = vmatpush1.xpose.msra.mxu0 0.0
    %650 = vmatprep.subr.mxu0 0.0
    %651 = vmatpush1.xpose.msra.mxu0 0.0
    %652 = vmatprep.subr.mxu0 0.0
    %653 = vmatpush1.xpose.msra.mxu0 0.0
    %654 = vmatprep.subr.mxu0 0.0
    %655 = vmatpush1.xpose.msra.mxu0 0.0
    %656 = vmatprep.subr.mxu0 0.0
    %657 = vmatpush1.xpose.msra.mxu0 0.0
    %658 = vmatprep.subr.mxu0 0.0
    %659 = vmatpush1.xpose.msra.mxu0 0.0
    %660 = vmatprep.subr.mxu0 0.0
    %661 = vmatpush1.xpose.msra.mxu0 0.0
    %662 = vmatprep.subr.mxu0 0.0
    %663 = vmatpush1.xpose.msra.mxu0 0.0
    %664 = vmatprep.subr.mxu0 0.0
    %665 = vmatpush1.xpose.msra.mxu0 0.0
    %666 = vmatprep.subr.mxu0 0.0
    %667 = vmatpush1.xpose.msra.mxu0 0.0
    %668 = vmatprep.subr.mxu0 0.0
    %669 = vmatpush1.xpose.msra.mxu0 0.0
    %670 = vmatprep.subr.mxu0 0.0
    %671 = vmatpush1.xpose.msra.mxu0 0.0
    %672 = vmatprep.subr.mxu0 0.0
    %673 = vmatpush1.xpose.msra.mxu0 0.0
    %674 = vmatprep.subr.mxu0 0.0
    %675 = vmatpush1.xpose.msra.mxu0 0.0
    %676 = vmatprep.subr.mxu0 0.0
    %677 = vmatpush1.xpose.msra.mxu0 0.0
    %678 = vmatprep.subr.mxu0 0.0
    %679 = vmatpush1.xpose.msra.mxu0 %v646
    %680 = vmatprep.subr.mxu0 0.0
    %681 = vmatpush2.xpose.msra.mxu0 0.0
    %682 = vmatprep.subr.mxu0 0.0
    %683 = vmatpush2.xpose.msra.mxu0 0.0
    %684 = vmatprep.subr.mxu0 0.0
    %685 = vmatpush2.xpose.msra.mxu0 0.0
    %686 = vmatprep.subr.mxu0 0.0
    %687 = vmatpush2.xpose.msra.mxu0 0.0
    %688 = vmatprep.subr.mxu0 0.0
    %689 = vmatpush2.xpose.msra.mxu0 0.0
    %690 = vmatprep.subr.mxu0 0.0
    %691 = vmatpush2.xpose.msra.mxu0 0.0
    %692 = vmatprep.subr.mxu0 0.0
    %693 = vmatpush2.xpose.msra.mxu0 0.0
    %694 = vmatprep.subr.mxu0 0.0
    %695 = vmatpush2.xpose.msra.mxu0 0.0
    %696 = vmatprep.subr.mxu0 0.0
    %697 = vmatpush2.xpose.msra.mxu0 0.0
    %698 = vmatprep.subr.mxu0 0.0
    %699 = vmatpush2.xpose.msra.mxu0 0.0
    %700 = vmatprep.subr.mxu0 0.0
    %701 = vmatpush2.xpose.msra.mxu0 0.0
    %702 = vmatprep.subr.mxu0 0.0
    %703 = vmatpush2.xpose.msra.mxu0 0.0
    %704 = vmatprep.subr.mxu0 0.0
    %705 = vmatpush2.xpose.msra.mxu0 0.0
    %706 = vmatprep.subr.mxu0 0.0
    %707 = vmatpush2.xpose.msra.mxu0 0.0
    %708 = vmatprep.subr.mxu0 0.0
    %709 = vmatpush2.xpose.msra.mxu0 0.0
    %710 = vmatprep.subr.mxu0 0.0
    %711 = vmatpush2.xpose.msra.mxu0 0.0
    %712 = vmatprep.mubr.f32.mxu0 0.0
    %713 = vmatmul.mubr.f32.gmra.mxu0 %v644
    %v714 = vpop.f32.mrf.mxu0
    %v715 = vadd.f32 0.0, %v714
    %v716 = vpop.f32.mrf.mxu0
    %717 = vdwg.mxu0
    %718 = vrot.lane.b32.xlu0 %v126, 120
    %v719 = vpop.permute.xlu0 %718
    %720 = vrot.lane.b32.xlu0 %v223, 120
    %v721 = vpop.permute.xlu0 %720
    %v722 = vsel %vm319, %v719, 0
    %v724 = vsel %vm319, %v721, 0
    %726 = vmatprep.subr.mxu0 0.0
    %727 = vmatpush1.xpose.msra.mxu0 0.0
    %728 = vmatprep.subr.mxu0 0.0
    %729 = vmatpush1.xpose.msra.mxu0 0.0
    %730 = vmatprep.subr.mxu0 0.0
    %731 = vmatpush1.xpose.msra.mxu0 0.0
    %732 = vmatprep.subr.mxu0 0.0
    %733 = vmatpush1.xpose.msra.mxu0 0.0
    %734 = vmatprep.subr.mxu0 0.0
    %735 = vmatpush1.xpose.msra.mxu0 0.0
    %736 = vmatprep.subr.mxu0 0.0
    %737 = vmatpush1.xpose.msra.mxu0 0.0
    %738 = vmatprep.subr.mxu0 0.0
    %739 = vmatpush1.xpose.msra.mxu0 0.0
    %740 = vmatprep.subr.mxu0 0.0
    %741 = vmatpush1.xpose.msra.mxu0 0.0
    %742 = vmatprep.subr.mxu0 0.0
    %743 = vmatpush1.xpose.msra.mxu0 0.0
    %744 = vmatprep.subr.mxu0 0.0
    %745 = vmatpush1.xpose.msra.mxu0 0.0
    %746 = vmatprep.subr.mxu0 0.0
    %747 = vmatpush1.xpose.msra.mxu0 0.0
    %748 = vmatprep.subr.mxu0 0.0
    %749 = vmatpush1.xpose.msra.mxu0 0.0
    %750 = vmatprep.subr.mxu0 0.0
    %751 = vmatpush1.xpose.msra.mxu0 0.0
    %752 = vmatprep.subr.mxu0 0.0
    %753 = vmatpush1.xpose.msra.mxu0 0.0
    %754 = vmatprep.subr.mxu0 0.0
    %755 = vmatpush1.xpose.msra.mxu0 0.0
    %756 = vmatprep.subr.mxu0 0.0
    %757 = vmatpush1.xpose.msra.mxu0 %v724
    %758 = vmatprep.subr.mxu0 0.0
    %759 = vmatpush2.xpose.msra.mxu0 0.0
    %760 = vmatprep.subr.mxu0 0.0
    %761 = vmatpush2.xpose.msra.mxu0 0.0
    %762 = vmatprep.subr.mxu0 0.0
    %763 = vmatpush2.xpose.msra.mxu0 0.0
    %764 = vmatprep.subr.mxu0 0.0
    %765 = vmatpush2.xpose.msra.mxu0 0.0
    %766 = vmatprep.subr.mxu0 0.0
    %767 = vmatpush2.xpose.msra.mxu0 0.0
    %768 = vmatprep.subr.mxu0 0.0
    %769 = vmatpush2.xpose.msra.mxu0 0.0
    %770 = vmatprep.subr.mxu0 0.0
    %771 = vmatpush2.xpose.msra.mxu0 0.0
    %772 = vmatprep.subr.mxu0 0.0
    %773 = vmatpush2.xpose.msra.mxu0 0.0
    %774 = vmatprep.subr.mxu0 0.0
    %775 = vmatpush2.xpose.msra.mxu0 0.0
    %776 = vmatprep.subr.mxu0 0.0
    %777 = vmatpush2.xpose.msra.mxu0 0.0
    %778 = vmatprep.subr.mxu0 0.0
    %779 = vmatpush2.xpose.msra.mxu0 0.0
    %780 = vmatprep.subr.mxu0 0.0
    %781 = vmatpush2.xpose.msra.mxu0 0.0
    %782 = vmatprep.subr.mxu0 0.0
    %783 = vmatpush2.xpose.msra.mxu0 0.0
    %784 = vmatprep.subr.mxu0 0.0
    %785 = vmatpush2.xpose.msra.mxu0 0.0
    %786 = vmatprep.subr.mxu0 0.0
    %787 = vmatpush2.xpose.msra.mxu0 0.0
    %788 = vmatprep.subr.mxu0 0.0
    %789 = vmatpush2.xpose.msra.mxu0 0.0
    %790 = vmatprep.mubr.f32.mxu0 0.0
    %791 = vmatmul.mubr.f32.gmra.mxu0 %v722
    %v792 = vpop.f32.mrf.mxu0
    %v793 = vadd.f32 0.0, %v792
    %v794 = vpop.f32.mrf.mxu0
    %795 = vdwg.mxu0
    %v796 = vsel %vm319, %v715, -inf
    %797 = vmax.xlane.f32.xlu0 %v796
    %v798 = vpop.xlane.xlu0 %797
    %v799 = vsel %vm319, %v793, -inf
    %800 = vmax.xlane.f32.xlu0 %v799
    %v801 = vpop.xlane.xlu0 %800
    %v802 = vsub.f32 %v715, %v798
    %v803 = vsub.f32 %v793, %v801
    %v804 = vmul.f32 %v802, 1.442695
    %v805 = vpow.pop %v804
    %v806 = vmul.f32 %v803, 1.442695
    %v807 = vpow.pop %v806
    %v808 = vsel %vm319, %v805, 0.0
    %809 = vadd.xlane.f32.xlu0 %v808
    %v810 = vpop.xlane.xlu0 %809
    %v811 = vsel %vm319, %v807, 0.0
    %812 = vadd.xlane.f32.xlu0 %v811
    %v813 = vpop.xlane.xlu0 %812
    %v814 = vrcp.pop %v810
    %v815 = vmul.f32 %v805, %v814
    %v816 = vrcp.pop %v813
    %v817 = vmul.f32 %v807, %v816
    %819 = vrot.lane.b32.xlu0 %v311, 120
    %v820 = vpop.permute.xlu0 %819
    %v823 = vsel %vm319, %v815, 0
    %825 = vmatprep.subr.mxu0 0.0
    %826 = vmatpush1.msra.mxu0 0.0
    %827 = vmatprep.subr.mxu0 0.0
    %828 = vmatpush1.msra.mxu0 0.0
    %829 = vmatprep.subr.mxu0 0.0
    %830 = vmatpush1.msra.mxu0 0.0
    %831 = vmatprep.subr.mxu0 0.0
    %832 = vmatpush1.msra.mxu0 0.0
    %833 = vmatprep.subr.mxu0 0.0
    %834 = vmatpush1.msra.mxu0 0.0
    %835 = vmatprep.subr.mxu0 0.0
    %836 = vmatpush1.msra.mxu0 0.0
    %837 = vmatprep.subr.mxu0 0.0
    %838 = vmatpush1.msra.mxu0 0.0
    %839 = vmatprep.subr.mxu0 0.0
    %840 = vmatpush1.msra.mxu0 0.0
    %841 = vmatprep.subr.mxu0 0.0
    %842 = vmatpush1.msra.mxu0 0.0
    %843 = vmatprep.subr.mxu0 0.0
    %844 = vmatpush1.msra.mxu0 0.0
    %845 = vmatprep.subr.mxu0 0.0
    %846 = vmatpush1.msra.mxu0 0.0
    %847 = vmatprep.subr.mxu0 0.0
    %848 = vmatpush1.msra.mxu0 0.0
    %849 = vmatprep.subr.mxu0 0.0
    %850 = vmatpush1.msra.mxu0 0.0
    %851 = vmatprep.subr.mxu0 0.0
    %852 = vmatpush1.msra.mxu0 0.0
    %853 = vmatprep.subr.mxu0 0.0
    %854 = vmatpush1.msra.mxu0 0.0
    %855 = vmatprep.subr.mxu0 0.0
    %856 = vmatpush1.msra.mxu0 %v820
    %857 = vmatprep.subr.mxu0 0.0
    %858 = vmatpush2.msra.mxu0 0.0
    %859 = vmatprep.subr.mxu0 0.0
    %860 = vmatpush2.msra.mxu0 0.0
    %861 = vmatprep.subr.mxu0 0.0
    %862 = vmatpush2.msra.mxu0 0.0
    %863 = vmatprep.subr.mxu0 0.0
    %864 = vmatpush2.msra.mxu0 0.0
    %865 = vmatprep.subr.mxu0 0.0
    %866 = vmatpush2.msra.mxu0 0.0
    %867 = vmatprep.subr.mxu0 0.0
    %868 = vmatpush2.msra.mxu0 0.0
    %869 = vmatprep.subr.mxu0 0.0
    %870 = vmatpush2.msra.mxu0 0.0
    %871 = vmatprep.subr.mxu0 0.0
    %872 = vmatpush2.msra.mxu0 0.0
    %873 = vmatprep.subr.mxu0 0.0
    %874 = vmatpush2.msra.mxu0 0.0
    %875 = vmatprep.subr.mxu0 0.0
    %876 = vmatpush2.msra.mxu0 0.0
    %877 = vmatprep.subr.mxu0 0.0
    %878 = vmatpush2.msra.mxu0 0.0
    %879 = vmatprep.subr.mxu0 0.0
    %880 = vmatpush2.msra.mxu0 0.0
    %881 = vmatprep.subr.mxu0 0.0
    %882 = vmatpush2.msra.mxu0 0.0
    %883 = vmatprep.subr.mxu0 0.0
    %884 = vmatpush2.msra.mxu0 0.0
    %885 = vmatprep.subr.mxu0 0.0
    %886 = vmatpush2.msra.mxu0 0.0
    %887 = vmatprep.subr.mxu0 0.0
    %888 = vmatpush2.msra.mxu0 0.0
    %889 = vmatprep.mubr.f32.mxu0 0.0
    %890 = vmatmul.mubr.f32.gmra.mxu0 %v823
    %v891 = vpop.f32.mrf.mxu0
    %v892 = vadd.f32 0.0, %v891
    %v893 = vpop.f32.mrf.mxu0
    %894 = vdwg.mxu0
    %896 = vrot.lane.b32.xlu0 %v316, 120
    %v897 = vpop.permute.xlu0 %896
    %v900 = vsel %vm319, %v817, 0
    %902 = vmatprep.subr.mxu0 0.0
    %903 = vmatpush1.msra.mxu0 0.0
    %904 = vmatprep.subr.mxu0 0.0
    %905 = vmatpush1.msra.mxu0 0.0
    %906 = vmatprep.subr.mxu0 0.0
    %907 = vmatpush1.msra.mxu0 0.0
    %908 = vmatprep.subr.mxu0 0.0
    %909 = vmatpush1.msra.mxu0 0.0
    %910 = vmatprep.subr.mxu0 0.0
    %911 = vmatpush1.msra.mxu0 0.0
    %912 = vmatprep.subr.mxu0 0.0
    %913 = vmatpush1.msra.mxu0 0.0
    %914 = vmatprep.subr.mxu0 0.0
    %915 = vmatpush1.msra.mxu0 0.0
    %916 = vmatprep.subr.mxu0 0.0
    %917 = vmatpush1.msra.mxu0 0.0
    %918 = vmatprep.subr.mxu0 0.0
    %919 = vmatpush1.msra.mxu0 0.0
    %920 = vmatprep.subr.mxu0 0.0
    %921 = vmatpush1.msra.mxu0 0.0
    %922 = vmatprep.subr.mxu0 0.0
    %923 = vmatpush1.msra.mxu0 0.0
    %924 = vmatprep.subr.mxu0 0.0
    %925 = vmatpush1.msra.mxu0 0.0
    %926 = vmatprep.subr.mxu0 0.0
    %927 = vmatpush1.msra.mxu0 0.0
    %928 = vmatprep.subr.mxu0 0.0
    %929 = vmatpush1.msra.mxu0 0.0
    %930 = vmatprep.subr.mxu0 0.0
    %931 = vmatpush1.msra.mxu0 0.0
    %932 = vmatprep.subr.mxu0 0.0
    %933 = vmatpush1.msra.mxu0 %v897
    %934 = vmatprep.subr.mxu0 0.0
    %935 = vmatpush2.msra.mxu0 0.0
    %936 = vmatprep.subr.mxu0 0.0
    %937 = vmatpush2.msra.mxu0 0.0
    %938 = vmatprep.subr.mxu0 0.0
    %939 = vmatpush2.msra.mxu0 0.0
    %940 = vmatprep.subr.mxu0 0.0
    %941 = vmatpush2.msra.mxu0 0.0
    %942 = vmatprep.subr.mxu0 0.0
    %943 = vmatpush2.msra.mxu0 0.0
    %944 = vmatprep.subr.mxu0 0.0
    %945 = vmatpush2.msra.mxu0 0.0
    %946 = vmatprep.subr.mxu0 0.0
    %947 = vmatpush2.msra.mxu0 0.0
    %948 = vmatprep.subr.mxu0 0.0
    %949 = vmatpush2.msra.mxu0 0.0
    %950 = vmatprep.subr.mxu0 0.0
    %951 = vmatpush2.msra.mxu0 0.0
    %952 = vmatprep.subr.mxu0 0.0
    %953 = vmatpush2.msra.mxu0 0.0
    %954 = vmatprep.subr.mxu0 0.0
    %955 = vmatpush2.msra.mxu0 0.0
    %956 = vmatprep.subr.mxu0 0.0
    %957 = vmatpush2.msra.mxu0 0.0
    %958 = vmatprep.subr.mxu0 0.0
    %959 = vmatpush2.msra.mxu0 0.0
    %960 = vmatprep.subr.mxu0 0.0
    %961 = vmatpush2.msra.mxu0 0.0
    %962 = vmatprep.subr.mxu0 0.0
    %963 = vmatpush2.msra.mxu0 0.0
    %964 = vmatprep.subr.mxu0 0.0
    %965 = vmatpush2.msra.mxu0 0.0
    %966 = vmatprep.mubr.f32.mxu0 0.0
    %967 = vmatmul.mubr.f32.gmra.mxu0 %v900
    %v968 = vpop.f32.mrf.mxu0
    %v969 = vadd.f32 0.0, %v968
    %v970 = vpop.f32.mrf.mxu0
    %971 = vdwg.mxu0
    %972 = vrot.lane.b32.xlu0 %v121, 112
    %v973 = vpop.permute.xlu0 %972
    %974 = vrot.lane.b32.xlu0 %v218, 112
    %v975 = vpop.permute.xlu0 %974
    %v976 = vsel %vm319, %v973, 0
    %v978 = vsel %vm319, %v975, 0
    %980 = vmatprep.subr.mxu0 0.0
    %981 = vmatpush1.xpose.msra.mxu0 0.0
    %982 = vmatprep.subr.mxu0 0.0
    %983 = vmatpush1.xpose.msra.mxu0 0.0
    %984 = vmatprep.subr.mxu0 0.0
    %985 = vmatpush1.xpose.msra.mxu0 0.0
    %986 = vmatprep.subr.mxu0 0.0
    %987 = vmatpush1.xpose.msra.mxu0 0.0
    %988 = vmatprep.subr.mxu0 0.0
    %989 = vmatpush1.xpose.msra.mxu0 0.0
    %990 = vmatprep.subr.mxu0 0.0
    %991 = vmatpush1.xpose.msra.mxu0 0.0
    %992 = vmatprep.subr.mxu0 0.0
    %993 = vmatpush1.xpose.msra.mxu0 0.0
    %994 = vmatprep.subr.mxu0 0.0
    %995 = vmatpush1.xpose.msra.mxu0 0.0
    %996 = vmatprep.subr.mxu0 0.0
    %997 = vmatpush1.xpose.msra.mxu0 0.0
    %998 = vmatprep.subr.mxu0 0.0
    %999 = vmatpush1.xpose.msra.mxu0 0.0
    %1000 = vmatprep.subr.mxu0 0.0
    %1001 = vmatpush1.xpose.msra.mxu0 0.0
    %1002 = vmatprep.subr.mxu0 0.0
    %1003 = vmatpush1.xpose.msra.mxu0 0.0
    %1004 = vmatprep.subr.mxu0 0.0
    %1005 = vmatpush1.xpose.msra.mxu0 0.0
    %1006 = vmatprep.subr.mxu0 0.0
    %1007 = vmatpush1.xpose.msra.mxu0 0.0
    %1008 = vmatprep.subr.mxu0 0.0
    %1009 = vmatpush1.xpose.msra.mxu0 0.0
    %1010 = vmatprep.subr.mxu0 0.0
    %1011 = vmatpush1.xpose.msra.mxu0 %v978
    %1012 = vmatprep.subr.mxu0 0.0
    %1013 = vmatpush2.xpose.msra.mxu0 0.0
    %1014 = vmatprep.subr.mxu0 0.0
    %1015 = vmatpush2.xpose.msra.mxu0 0.0
    %1016 = vmatprep.subr.mxu0 0.0
    %1017 = vmatpush2.xpose.msra.mxu0 0.0
    %1018 = vmatprep.subr.mxu0 0.0
    %1019 = vmatpush2.xpose.msra.mxu0 0.0
    %1020 = vmatprep.subr.mxu0 0.0
    %1021 = vmatpush2.xpose.msra.mxu0 0.0
    %1022 = vmatprep.subr.mxu0 0.0
    %1023 = vmatpush2.xpose.msra.mxu0 0.0
    %1024 = vmatprep.subr.mxu0 0.0
    %1025 = vmatpush2.xpose.msra.mxu0 0.0
    %1026 = vmatprep.subr.mxu0 0.0
    %1027 = vmatpush2.xpose.msra.mxu0 0.0
    %1028 = vmatprep.subr.mxu0 0.0
    %1029 = vmatpush2.xpose.msra.mxu0 0.0
    %1030 = vmatprep.subr.mxu0 0.0
    %1031 = vmatpush2.xpose.msra.mxu0 0.0
    %1032 = vmatprep.subr.mxu0 0.0
    %1033 = vmatpush2.xpose.msra.mxu0 0.0
    %1034 = vmatprep.subr.mxu0 0.0
    %1035 = vmatpush2.xpose.msra.mxu0 0.0
    %1036 = vmatprep.subr.mxu0 0.0
    %1037 = vmatpush2.xpose.msra.mxu0 0.0
    %1038 = vmatprep.subr.mxu0 0.0
    %1039 = vmatpush2.xpose.msra.mxu0 0.0
    %1040 = vmatprep.subr.mxu0 0.0
    %1041 = vmatpush2.xpose.msra.mxu0 0.0
    %1042 = vmatprep.subr.mxu0 0.0
    %1043 = vmatpush2.xpose.msra.mxu0 0.0
    %1044 = vmatprep.mubr.f32.mxu0 0.0
    %1045 = vmatmul.mubr.f32.gmra.mxu0 %v976
    %v1046 = vpop.f32.mrf.mxu0
    %v1047 = vadd.f32 0.0, %v1046
    %v1048 = vpop.f32.mrf.mxu0
    %1049 = vdwg.mxu0
    %1050 = vrot.lane.b32.xlu0 %v126, 112
    %v1051 = vpop.permute.xlu0 %1050
    %1052 = vrot.lane.b32.xlu0 %v223, 112
    %v1053 = vpop.permute.xlu0 %1052
    %v1054 = vsel %vm319, %v1051, 0
    %v1056 = vsel %vm319, %v1053, 0
    %1058 = vmatprep.subr.mxu0 0.0
    %1059 = vmatpush1.xpose.msra.mxu0 0.0
    %1060 = vmatprep.subr.mxu0 0.0
    %1061 = vmatpush1.xpose.msra.mxu0 0.0
    %1062 = vmatprep.subr.mxu0 0.0
    %1063 = vmatpush1.xpose.msra.mxu0 0.0
    %1064 = vmatprep.subr.mxu0 0.0
    %1065 = vmatpush1.xpose.msra.mxu0 0.0
    %1066 = vmatprep.subr.mxu0 0.0
    %1067 = vmatpush1.xpose.msra.mxu0 0.0
    %1068 = vmatprep.subr.mxu0 0.0
    %1069 = vmatpush1.xpose.msra.mxu0 0.0
    %1070 = vmatprep.subr.mxu0 0.0
    %1071 = vmatpush1.xpose.msra.mxu0 0.0
    %1072 = vmatprep.subr.mxu0 0.0
    %1073 = vmatpush1.xpose.msra.mxu0 0.0
    %1074 = vmatprep.subr.mxu0 0.0
    %1075 = vmatpush1.xpose.msra.mxu0 0.0
    %1076 = vmatprep.subr.mxu0 0.0
    %1077 = vmatpush1.xpose.msra.mxu0 0.0
    %1078 = vmatprep.subr.mxu0 0.0
    %1079 = vmatpush1.xpose.msra.mxu0 0.0
    %1080 = vmatprep.subr.mxu0 0.0
    %1081 = vmatpush1.xpose.msra.mxu0 0.0
    %1082 = vmatprep.subr.mxu0 0.0
    %1083 = vmatpush1.xpose.msra.mxu0 0.0
    %1084 = vmatprep.subr.mxu0 0.0
    %1085 = vmatpush1.xpose.msra.mxu0 0.0
    %1086 = vmatprep.subr.mxu0 0.0
    %1087 = vmatpush1.xpose.msra.mxu0 0.0
    %1088 = vmatprep.subr.mxu0 0.0
    %1089 = vmatpush1.xpose.msra.mxu0 %v1056
    %1090 = vmatprep.subr.mxu0 0.0
    %1091 = vmatpush2.xpose.msra.mxu0 0.0
    %1092 = vmatprep.subr.mxu0 0.0
    %1093 = vmatpush2.xpose.msra.mxu0 0.0
    %1094 = vmatprep.subr.mxu0 0.0
    %1095 = vmatpush2.xpose.msra.mxu0 0.0
    %1096 = vmatprep.subr.mxu0 0.0
    %1097 = vmatpush2.xpose.msra.mxu0 0.0
    %1098 = vmatprep.subr.mxu0 0.0
    %1099 = vmatpush2.xpose.msra.mxu0 0.0
    %1100 = vmatprep.subr.mxu0 0.0
    %1101 = vmatpush2.xpose.msra.mxu0 0.0
    %1102 = vmatprep.subr.mxu0 0.0
    %1103 = vmatpush2.xpose.msra.mxu0 0.0
    %1104 = vmatprep.subr.mxu0 0.0
    %1105 = vmatpush2.xpose.msra.mxu0 0.0
    %1106 = vmatprep.subr.mxu0 0.0
    %1107 = vmatpush2.xpose.msra.mxu0 0.0
    %1108 = vmatprep.subr.mxu0 0.0
    %1109 = vmatpush2.xpose.msra.mxu0 0.0
    %1110 = vmatprep.subr.mxu0 0.0
    %1111 = vmatpush2.xpose.msra.mxu0 0.0
    %1112 = vmatprep.subr.mxu0 0.0
    %1113 = vmatpush2.xpose.msra.mxu0 0.0
    %1114 = vmatprep.subr.mxu0 0.0
    %1115 = vmatpush2.xpose.msra.mxu0 0.0
    %1116 = vmatprep.subr.mxu0 0.0
    %1117 = vmatpush2.xpose.msra.mxu0 0.0
    %1118 = vmatprep.subr.mxu0 0.0
    %1119 = vmatpush2.xpose.msra.mxu0 0.0
    %1120 = vmatprep.subr.mxu0 0.0
    %1121 = vmatpush2.xpose.msra.mxu0 0.0
    %1122 = vmatprep.mubr.f32.mxu0 0.0
    %1123 = vmatmul.mubr.f32.gmra.mxu0 %v1054
    %v1124 = vpop.f32.mrf.mxu0
    %v1125 = vadd.f32 0.0, %v1124
    %v1126 = vpop.f32.mrf.mxu0
    %1127 = vdwg.mxu0
    %v1128 = vsel %vm319, %v1047, -inf
    %1129 = vmax.xlane.f32.xlu0 %v1128
    %v1130 = vpop.xlane.xlu0 %1129
    %v1131 = vsel %vm319, %v1125, -inf
    %1132 = vmax.xlane.f32.xlu0 %v1131
    %v1133 = vpop.xlane.xlu0 %1132
    %v1134 = vsub.f32 %v1047, %v1130
    %v1135 = vsub.f32 %v1125, %v1133
    %v1136 = vmul.f32 %v1134, 1.442695
    %v1137 = vpow.pop %v1136
    %v1138 = vmul.f32 %v1135, 1.442695
    %v1139 = vpow.pop %v1138
    %v1140 = vsel %vm319, %v1137, 0.0
    %1141 = vadd.xlane.f32.xlu0 %v1140
    %v1142 = vpop.xlane.xlu0 %1141
    %v1143 = vsel %vm319, %v1139, 0.0
    %1144 = vadd.xlane.f32.xlu0 %v1143
    %v1145 = vpop.xlane.xlu0 %1144
    %v1146 = vrcp.pop %v1142
    %v1147 = vmul.f32 %v1137, %v1146
    %v1148 = vrcp.pop %v1145
    %v1149 = vmul.f32 %v1139, %v1148
    %1150 = vrot.lane.b32.xlu0 %v311, 112
    %v1151 = vpop.permute.xlu0 %1150
    %v1154 = vsel %vm319, %v1147, 0
    %1156 = vmatprep.subr.mxu0 0.0
    %1157 = vmatpush1.msra.mxu0 0.0
    %1158 = vmatprep.subr.mxu0 0.0
    %1159 = vmatpush1.msra.mxu0 0.0
    %1160 = vmatprep.subr.mxu0 0.0
    %1161 = vmatpush1.msra.mxu0 0.0
    %1162 = vmatprep.subr.mxu0 0.0
    %1163 = vmatpush1.msra.mxu0 0.0
    %1164 = vmatprep.subr.mxu0 0.0
    %1165 = vmatpush1.msra.mxu0 0.0
    %1166 = vmatprep.subr.mxu0 0.0
    %1167 = vmatpush1.msra.mxu0 0.0
    %1168 = vmatprep.subr.mxu0 0.0
    %1169 = vmatpush1.msra.mxu0 0.0
    %1170 = vmatprep.subr.mxu0 0.0
    %1171 = vmatpush1.msra.mxu0 0.0
    %1172 = vmatprep.subr.mxu0 0.0
    %1173 = vmatpush1.msra.mxu0 0.0
    %1174 = vmatprep.subr.mxu0 0.0
    %1175 = vmatpush1.msra.mxu0 0.0
    %1176 = vmatprep.subr.mxu0 0.0
    %1177 = vmatpush1.msra.mxu0 0.0
    %1178 = vmatprep.subr.mxu0 0.0
    %1179 = vmatpush1.msra.mxu0 0.0
    %1180 = vmatprep.subr.mxu0 0.0
    %1181 = vmatpush1.msra.mxu0 0.0
    %1182 = vmatprep.subr.mxu0 0.0
    %1183 = vmatpush1.msra.mxu0 0.0
    %1184 = vmatprep.subr.mxu0 0.0
    %1185 = vmatpush1.msra.mxu0 0.0
    %1186 = vmatprep.subr.mxu0 0.0
    %1187 = vmatpush1.msra.mxu0 %v1151
    %1188 = vmatprep.subr.mxu0 0.0
    %1189 = vmatpush2.msra.mxu0 0.0
    %1190 = vmatprep.subr.mxu0 0.0
    %1191 = vmatpush2.msra.mxu0 0.0
    %1192 = vmatprep.subr.mxu0 0.0
    %1193 = vmatpush2.msra.mxu0 0.0
    %1194 = vmatprep.subr.mxu0 0.0
    %1195 = vmatpush2.msra.mxu0 0.0
    %1196 = vmatprep.subr.mxu0 0.0
    %1197 = vmatpush2.msra.mxu0 0.0
    %1198 = vmatprep.subr.mxu0 0.0
    %1199 = vmatpush2.msra.mxu0 0.0
    %1200 = vmatprep.subr.mxu0 0.0
    %1201 = vmatpush2.msra.mxu0 0.0
    %1202 = vmatprep.subr.mxu0 0.0
    %1203 = vmatpush2.msra.mxu0 0.0
    %1204 = vmatprep.subr.mxu0 0.0
    %1205 = vmatpush2.msra.mxu0 0.0
    %1206 = vmatprep.subr.mxu0 0.0
    %1207 = vmatpush2.msra.mxu0 0.0
    %1208 = vmatprep.subr.mxu0 0.0
    %1209 = vmatpush2.msra.mxu0 0.0
    %1210 = vmatprep.subr.mxu0 0.0
    %1211 = vmatpush2.msra.mxu0 0.0
    %1212 = vmatprep.subr.mxu0 0.0
    %1213 = vmatpush2.msra.mxu0 0.0
    %1214 = vmatprep.subr.mxu0 0.0
    %1215 = vmatpush2.msra.mxu0 0.0
    %1216 = vmatprep.subr.mxu0 0.0
    %1217 = vmatpush2.msra.mxu0 0.0
    %1218 = vmatprep.subr.mxu0 0.0
    %1219 = vmatpush2.msra.mxu0 0.0
    %1220 = vmatprep.mubr.f32.mxu0 0.0
    %1221 = vmatmul.mubr.f32.gmra.mxu0 %v1154
    %v1222 = vpop.f32.mrf.mxu0
    %v1223 = vadd.f32 0.0, %v1222
    %v1224 = vpop.f32.mrf.mxu0
    %1225 = vdwg.mxu0
    %1226 = vrot.lane.b32.xlu0 %v316, 112
    %v1227 = vpop.permute.xlu0 %1226
    %v1230 = vsel %vm319, %v1149, 0
    %1232 = vmatprep.subr.mxu0 0.0
    %1233 = vmatpush1.msra.mxu0 0.0
    %1234 = vmatprep.subr.mxu0 0.0
    %1235 = vmatpush1.msra.mxu0 0.0
    %1236 = vmatprep.subr.mxu0 0.0
    %1237 = vmatpush1.msra.mxu0 0.0
    %1238 = vmatprep.subr.mxu0 0.0
    %1239 = vmatpush1.msra.mxu0 0.0
    %1240 = vmatprep.subr.mxu0 0.0
    %1241 = vmatpush1.msra.mxu0 0.0
    %1242 = vmatprep.subr.mxu0 0.0
    %1243 = vmatpush1.msra.mxu0 0.0
    %1244 = vmatprep.subr.mxu0 0.0
    %1245 = vmatpush1.msra.mxu0 0.0
    %1246 = vmatprep.subr.mxu0 0.0
    %1247 = vmatpush1.msra.mxu0 0.0
    %1248 = vmatprep.subr.mxu0 0.0
    %1249 = vmatpush1.msra.mxu0 0.0
    %1250 = vmatprep.subr.mxu0 0.0
    %1251 = vmatpush1.msra.mxu0 0.0
    %1252 = vmatprep.subr.mxu0 0.0
    %1253 = vmatpush1.msra.mxu0 0.0
    %1254 = vmatprep.subr.mxu0 0.0
    %1255 = vmatpush1.msra.mxu0 0.0
    %1256 = vmatprep.subr.mxu0 0.0
    %1257 = vmatpush1.msra.mxu0 0.0
    %1258 = vmatprep.subr.mxu0 0.0
    %1259 = vmatpush1.msra.mxu0 0.0
    %1260 = vmatprep.subr.mxu0 0.0
    %1261 = vmatpush1.msra.mxu0 0.0
    %1262 = vmatprep.subr.mxu0 0.0
    %1263 = vmatpush1.msra.mxu0 %v1227
    %1264 = vmatprep.subr.mxu0 0.0
    %1265 = vmatpush2.msra.mxu0 0.0
    %1266 = vmatprep.subr.mxu0 0.0
    %1267 = vmatpush2.msra.mxu0 0.0
    %1268 = vmatprep.subr.mxu0 0.0
    %1269 = vmatpush2.msra.mxu0 0.0
    %1270 = vmatprep.subr.mxu0 0.0
    %1271 = vmatpush2.msra.mxu0 0.0
    %1272 = vmatprep.subr.mxu0 0.0
    %1273 = vmatpush2.msra.mxu0 0.0
    %1274 = vmatprep.subr.mxu0 0.0
    %1275 = vmatpush2.msra.mxu0 0.0
    %1276 = vmatprep.subr.mxu0 0.0
    %1277 = vmatpush2.msra.mxu0 0.0
    %1278 = vmatprep.subr.mxu0 0.0
    %1279 = vmatpush2.msra.mxu0 0.0
    %1280 = vmatprep.subr.mxu0 0.0
    %1281 = vmatpush2.msra.mxu0 0.0
    %1282 = vmatprep.subr.mxu0 0.0
    %1283 = vmatpush2.msra.mxu0 0.0
    %1284 = vmatprep.subr.mxu0 0.0
    %1285 = vmatpush2.msra.mxu0 0.0
    %1286 = vmatprep.subr.mxu0 0.0
    %1287 = vmatpush2.msra.mxu0 0.0
    %1288 = vmatprep.subr.mxu0 0.0
    %1289 = vmatpush2.msra.mxu0 0.0
    %1290 = vmatprep.subr.mxu0 0.0
    %1291 = vmatpush2.msra.mxu0 0.0
    %1292 = vmatprep.subr.mxu0 0.0
    %1293 = vmatpush2.msra.mxu0 0.0
    %1294 = vmatprep.subr.mxu0 0.0
    %1295 = vmatpush2.msra.mxu0 0.0
    %1296 = vmatprep.mubr.f32.mxu0 0.0
    %1297 = vmatmul.mubr.f32.gmra.mxu0 %v1230
    %v1298 = vpop.f32.mrf.mxu0
    %v1299 = vadd.f32 0.0, %v1298
    %v1300 = vpop.f32.mrf.mxu0
    %1301 = vdwg.mxu0
    %1302 = vrot.lane.b32.xlu0 %v121, 104
    %v1303 = vpop.permute.xlu0 %1302
    %1304 = vrot.lane.b32.xlu0 %v218, 104
    %v1305 = vpop.permute.xlu0 %1304
    %v1306 = vsel %vm319, %v1303, 0
    %v1308 = vsel %vm319, %v1305, 0
    %1310 = vmatprep.subr.mxu0 0.0
    %1311 = vmatpush1.xpose.msra.mxu0 0.0
    %1312 = vmatprep.subr.mxu0 0.0
    %1313 = vmatpush1.xpose.msra.mxu0 0.0
    %1314 = vmatprep.subr.mxu0 0.0
    %1315 = vmatpush1.xpose.msra.mxu0 0.0
    %1316 = vmatprep.subr.mxu0 0.0
    %1317 = vmatpush1.xpose.msra.mxu0 0.0
    %1318 = vmatprep.subr.mxu0 0.0
    %1319 = vmatpush1.xpose.msra.mxu0 0.0
    %1320 = vmatprep.subr.mxu0 0.0
    %1321 = vmatpush1.xpose.msra.mxu0 0.0
    %1322 = vmatprep.subr.mxu0 0.0
    %1323 = vmatpush1.xpose.msra.mxu0 0.0
    %1324 = vmatprep.subr.mxu0 0.0
    %1325 = vmatpush1.xpose.msra.mxu0 0.0
    %1326 = vmatprep.subr.mxu0 0.0
    %1327 = vmatpush1.xpose.msra.mxu0 0.0
    %1328 = vmatprep.subr.mxu0 0.0
    %1329 = vmatpush1.xpose.msra.mxu0 0.0
    %1330 = vmatprep.subr.mxu0 0.0
    %1331 = vmatpush1.xpose.msra.mxu0 0.0
    %1332 = vmatprep.subr.mxu0 0.0
    %1333 = vmatpush1.xpose.msra.mxu0 0.0
    %1334 = vmatprep.subr.mxu0 0.0
    %1335 = vmatpush1.xpose.msra.mxu0 0.0
    %1336 = vmatprep.subr.mxu0 0.0
    %1337 = vmatpush1.xpose.msra.mxu0 0.0
    %1338 = vmatprep.subr.mxu0 0.0
    %1339 = vmatpush1.xpose.msra.mxu0 0.0
    %1340 = vmatprep.subr.mxu0 0.0
    %1341 = vmatpush1.xpose.msra.mxu0 %v1308
    %1342 = vmatprep.subr.mxu0 0.0
    %1343 = vmatpush2.xpose.msra.mxu0 0.0
    %1344 = vmatprep.subr.mxu0 0.0
    %1345 = vmatpush2.xpose.msra.mxu0 0.0
    %1346 = vmatprep.subr.mxu0 0.0
    %1347 = vmatpush2.xpose.msra.mxu0 0.0
    %1348 = vmatprep.subr.mxu0 0.0
    %1349 = vmatpush2.xpose.msra.mxu0 0.0
    %1350 = vmatprep.subr.mxu0 0.0
    %1351 = vmatpush2.xpose.msra.mxu0 0.0
    %1352 = vmatprep.subr.mxu0 0.0
    %1353 = vmatpush2.xpose.msra.mxu0 0.0
    %1354 = vmatprep.subr.mxu0 0.0
    %1355 = vmatpush2.xpose.msra.mxu0 0.0
    %1356 = vmatprep.subr.mxu0 0.0
    %1357 = vmatpush2.xpose.msra.mxu0 0.0
    %1358 = vmatprep.subr.mxu0 0.0
    %1359 = vmatpush2.xpose.msra.mxu0 0.0
    %1360 = vmatprep.subr.mxu0 0.0
    %1361 = vmatpush2.xpose.msra.mxu0 0.0
    %1362 = vmatprep.subr.mxu0 0.0
    %1363 = vmatpush2.xpose.msra.mxu0 0.0
    %1364 = vmatprep.subr.mxu0 0.0
    %1365 = vmatpush2.xpose.msra.mxu0 0.0
    %1366 = vmatprep.subr.mxu0 0.0
    %1367 = vmatpush2.xpose.msra.mxu0 0.0
    %1368 = vmatprep.subr.mxu0 0.0
    %1369 = vmatpush2.xpose.msra.mxu0 0.0
    %1370 = vmatprep.subr.mxu0 0.0
    %1371 = vmatpush2.xpose.msra.mxu0 0.0
    %1372 = vmatprep.subr.mxu0 0.0
    %1373 = vmatpush2.xpose.msra.mxu0 0.0
    %1374 = vmatprep.mubr.f32.mxu0 0.0
    %1375 = vmatmul.mubr.f32.gmra.mxu0 %v1306
    %v1376 = vpop.f32.mrf.mxu0
    %v1377 = vadd.f32 0.0, %v1376
    %v1378 = vpop.f32.mrf.mxu0
    %1379 = vdwg.mxu0
    %1380 = vrot.lane.b32.xlu0 %v126, 104
    %v1381 = vpop.permute.xlu0 %1380
    %1382 = vrot.lane.b32.xlu0 %v223, 104
    %v1383 = vpop.permute.xlu0 %1382
    %v1384 = vsel %vm319, %v1381, 0
    %v1386 = vsel %vm319, %v1383, 0
    %1388 = vmatprep.subr.mxu0 0.0
    %1389 = vmatpush1.xpose.msra.mxu0 0.0
    %1390 = vmatprep.subr.mxu0 0.0
    %1391 = vmatpush1.xpose.msra.mxu0 0.0
    %1392 = vmatprep.subr.mxu0 0.0
    %1393 = vmatpush1.xpose.msra.mxu0 0.0
    %1394 = vmatprep.subr.mxu0 0.0
    %1395 = vmatpush1.xpose.msra.mxu0 0.0
    %1396 = vmatprep.subr.mxu0 0.0
    %1397 = vmatpush1.xpose.msra.mxu0 0.0
    %1398 = vmatprep.subr.mxu0 0.0
    %1399 = vmatpush1.xpose.msra.mxu0 0.0
    %1400 = vmatprep.subr.mxu0 0.0
    %1401 = vmatpush1.xpose.msra.mxu0 0.0
    %1402 = vmatprep.subr.mxu0 0.0
    %1403 = vmatpush1.xpose.msra.mxu0 0.0
    %1404 = vmatprep.subr.mxu0 0.0
    %1405 = vmatpush1.xpose.msra.mxu0 0.0
    %1406 = vmatprep.subr.mxu0 0.0
    %1407 = vmatpush1.xpose.msra.mxu0 0.0
    %1408 = vmatprep.subr.mxu0 0.0
    %1409 = vmatpush1.xpose.msra.mxu0 0.0
    %1410 = vmatprep.subr.mxu0 0.0
    %1411 = vmatpush1.xpose.msra.mxu0 0.0
    %1412 = vmatprep.subr.mxu0 0.0
    %1413 = vmatpush1.xpose.msra.mxu0 0.0
    %1414 = vmatprep.subr.mxu0 0.0
    %1415 = vmatpush1.xpose.msra.mxu0 0.0
    %1416 = vmatprep.subr.mxu0 0.0
    %1417 = vmatpush1.xpose.msra.mxu0 0.0
    %1418 = vmatprep.subr.mxu0 0.0
    %1419 = vmatpush1.xpose.msra.mxu0 %v1386
    %1420 = vmatprep.subr.mxu0 0.0
    %1421 = vmatpush2.xpose.msra.mxu0 0.0
    %1422 = vmatprep.subr.mxu0 0.0
    %1423 = vmatpush2.xpose.msra.mxu0 0.0
    %1424 = vmatprep.subr.mxu0 0.0
    %1425 = vmatpush2.xpose.msra.mxu0 0.0
    %1426 = vmatprep.subr.mxu0 0.0
    %1427 = vmatpush2.xpose.msra.mxu0 0.0
    %1428 = vmatprep.subr.mxu0 0.0
    %1429 = vmatpush2.xpose.msra.mxu0 0.0
    %1430 = vmatprep.subr.mxu0 0.0
    %1431 = vmatpush2.xpose.msra.mxu0 0.0
    %1432 = vmatprep.subr.mxu0 0.0
    %1433 = vmatpush2.xpose.msra.mxu0 0.0
    %1434 = vmatprep.subr.mxu0 0.0
    %1435 = vmatpush2.xpose.msra.mxu0 0.0
    %1436 = vmatprep.subr.mxu0 0.0
    %1437 = vmatpush2.xpose.msra.mxu0 0.0
    %1438 = vmatprep.subr.mxu0 0.0
    %1439 = vmatpush2.xpose.msra.mxu0 0.0
    %1440 = vmatprep.subr.mxu0 0.0
    %1441 = vmatpush2.xpose.msra.mxu0 0.0
    %1442 = vmatprep.subr.mxu0 0.0
    %1443 = vmatpush2.xpose.msra.mxu0 0.0
    %1444 = vmatprep.subr.mxu0 0.0
    %1445 = vmatpush2.xpose.msra.mxu0 0.0
    %1446 = vmatprep.subr.mxu0 0.0
    %1447 = vmatpush2.xpose.msra.mxu0 0.0
    %1448 = vmatprep.subr.mxu0 0.0
    %1449 = vmatpush2.xpose.msra.mxu0 0.0
    %1450 = vmatprep.subr.mxu0 0.0
    %1451 = vmatpush2.xpose.msra.mxu0 0.0
    %1452 = vmatprep.mubr.f32.mxu0 0.0
    %1453 = vmatmul.mubr.f32.gmra.mxu0 %v1384
    %v1454 = vpop.f32.mrf.mxu0
    %v1455 = vadd.f32 0.0, %v1454
    %v1456 = vpop.f32.mrf.mxu0
    %1457 = vdwg.mxu0
    %v1458 = vsel %vm319, %v1377, -inf
    %1459 = vmax.xlane.f32.xlu0 %v1458
    %v1460 = vpop.xlane.xlu0 %1459
    %v1461 = vsel %vm319, %v1455, -inf
    %1462 = vmax.xlane.f32.xlu0 %v1461
    %v1463 = vpop.xlane.xlu0 %1462
    %v1464 = vsub.f32 %v1377, %v1460
    %v1465 = vsub.f32 %v1455, %v1463
    %v1466 = vmul.f32 %v1464, 1.442695
    %v1467 = vpow.pop %v1466
    %v1468 = vmul.f32 %v1465, 1.442695
    %v1469 = vpow.pop %v1468
    %v1470 = vsel %vm319, %v1467, 0.0
    %1471 = vadd.xlane.f32.xlu0 %v1470
    %v1472 = vpop.xlane.xlu0 %1471
    %v1473 = vsel %vm319, %v1469, 0.0
    %1474 = vadd.xlane.f32.xlu0 %v1473
    %v1475 = vpop.xlane.xlu0 %1474
    %v1476 = vrcp.pop %v1472
    %v1477 = vmul.f32 %v1467, %v1476
    %v1478 = vrcp.pop %v1475
    %v1479 = vmul.f32 %v1469, %v1478
    %1480 = vrot.lane.b32.xlu0 %v311, 104
    %v1481 = vpop.permute.xlu0 %1480
    %v1484 = vsel %vm319, %v1477, 0
    %1486 = vmatprep.subr.mxu0 0.0
    %1487 = vmatpush1.msra.mxu0 0.0
    %1488 = vmatprep.subr.mxu0 0.0
    %1489 = vmatpush1.msra.mxu0 0.0
    %1490 = vmatprep.subr.mxu0 0.0
    %1491 = vmatpush1.msra.mxu0 0.0
    %1492 = vmatprep.subr.mxu0 0.0
    %1493 = vmatpush1.msra.mxu0 0.0
    %1494 = vmatprep.subr.mxu0 0.0
    %1495 = vmatpush1.msra.mxu0 0.0
    %1496 = vmatprep.subr.mxu0 0.0
    %1497 = vmatpush1.msra.mxu0 0.0
    %1498 = vmatprep.subr.mxu0 0.0
    %1499 = vmatpush1.msra.mxu0 0.0
    %1500 = vmatprep.subr.mxu0 0.0
    %1501 = vmatpush1.msra.mxu0 0.0
    %1502 = vmatprep.subr.mxu0 0.0
    %1503 = vmatpush1.msra.mxu0 0.0
    %1504 = vmatprep.subr.mxu0 0.0
    %1505 = vmatpush1.msra.mxu0 0.0
    %1506 = vmatprep.subr.mxu0 0.0
    %1507 = vmatpush1.msra.mxu0 0.0
    %1508 = vmatprep.subr.mxu0 0.0
    %1509 = vmatpush1.msra.mxu0 0.0
    %1510 = vmatprep.subr.mxu0 0.0
    %1511 = vmatpush1.msra.mxu0 0.0
    %1512 = vmatprep.subr.mxu0 0.0
    %1513 = vmatpush1.msra.mxu0 0.0
    %1514 = vmatprep.subr.mxu0 0.0
    %1515 = vmatpush1.msra.mxu0 0.0
    %1516 = vmatprep.subr.mxu0 0.0
    %1517 = vmatpush1.msra.mxu0 %v1481
    %1518 = vmatprep.subr.mxu0 0.0
    %1519 = vmatpush2.msra.mxu0 0.0
    %1520 = vmatprep.subr.mxu0 0.0
    %1521 = vmatpush2.msra.mxu0 0.0
    %1522 = vmatprep.subr.mxu0 0.0
    %1523 = vmatpush2.msra.mxu0 0.0
    %1524 = vmatprep.subr.mxu0 0.0
    %1525 = vmatpush2.msra.mxu0 0.0
    %1526 = vmatprep.subr.mxu0 0.0
    %1527 = vmatpush2.msra.mxu0 0.0
    %1528 = vmatprep.subr.mxu0 0.0
    %1529 = vmatpush2.msra.mxu0 0.0
    %1530 = vmatprep.subr.mxu0 0.0
    %1531 = vmatpush2.msra.mxu0 0.0
    %1532 = vmatprep.subr.mxu0 0.0
    %1533 = vmatpush2.msra.mxu0 0.0
    %1534 = vmatprep.subr.mxu0 0.0
    %1535 = vmatpush2.msra.mxu0 0.0
    %1536 = vmatprep.subr.mxu0 0.0
    %1537 = vmatpush2.msra.mxu0 0.0
    %1538 = vmatprep.subr.mxu0 0.0
    %1539 = vmatpush2.msra.mxu0 0.0
    %1540 = vmatprep.subr.mxu0 0.0
    %1541 = vmatpush2.msra.mxu0 0.0
    %1542 = vmatprep.subr.mxu0 0.0
    %1543 = vmatpush2.msra.mxu0 0.0
    %1544 = vmatprep.subr.mxu0 0.0
    %1545 = vmatpush2.msra.mxu0 0.0
    %1546 = vmatprep.subr.mxu0 0.0
    %1547 = vmatpush2.msra.mxu0 0.0
    %1548 = vmatprep.subr.mxu0 0.0
    %1549 = vmatpush2.msra.mxu0 0.0
    %1550 = vmatprep.mubr.f32.mxu0 0.0
    %1551 = vmatmul.mubr.f32.gmra.mxu0 %v1484
    %v1552 = vpop.f32.mrf.mxu0
    %v1553 = vadd.f32 0.0, %v1552
    %v1554 = vpop.f32.mrf.mxu0
    %1555 = vdwg.mxu0
    %1556 = vrot.lane.b32.xlu0 %v316, 104
    %v1557 = vpop.permute.xlu0 %1556
    %v1560 = vsel %vm319, %v1479, 0
    %1562 = vmatprep.subr.mxu0 0.0
    %1563 = vmatpush1.msra.mxu0 0.0
    %1564 = vmatprep.subr.mxu0 0.0
    %1565 = vmatpush1.msra.mxu0 0.0
    %1566 = vmatprep.subr.mxu0 0.0
    %1567 = vmatpush1.msra.mxu0 0.0
    %1568 = vmatprep.subr.mxu0 0.0
    %1569 = vmatpush1.msra.mxu0 0.0
    %1570 = vmatprep.subr.mxu0 0.0
    %1571 = vmatpush1.msra.mxu0 0.0
    %1572 = vmatprep.subr.mxu0 0.0
    %1573 = vmatpush1.msra.mxu0 0.0
    %1574 = vmatprep.subr.mxu0 0.0
    %1575 = vmatpush1.msra.mxu0 0.0
    %1576 = vmatprep.subr.mxu0 0.0
    %1577 = vmatpush1.msra.mxu0 0.0
    %1578 = vmatprep.subr.mxu0 0.0
    %1579 = vmatpush1.msra.mxu0 0.0
    %1580 = vmatprep.subr.mxu0 0.0
    %1581 = vmatpush1.msra.mxu0 0.0
    %1582 = vmatprep.subr.mxu0 0.0
    %1583 = vmatpush1.msra.mxu0 0.0
    %1584 = vmatprep.subr.mxu0 0.0
    %1585 = vmatpush1.msra.mxu0 0.0
    %1586 = vmatprep.subr.mxu0 0.0
    %1587 = vmatpush1.msra.mxu0 0.0
    %1588 = vmatprep.subr.mxu0 0.0
    %1589 = vmatpush1.msra.mxu0 0.0
    %1590 = vmatprep.subr.mxu0 0.0
    %1591 = vmatpush1.msra.mxu0 0.0
    %1592 = vmatprep.subr.mxu0 0.0
    %1593 = vmatpush1.msra.mxu0 %v1557
    %1594 = vmatprep.subr.mxu0 0.0
    %1595 = vmatpush2.msra.mxu0 0.0
    %1596 = vmatprep.subr.mxu0 0.0
    %1597 = vmatpush2.msra.mxu0 0.0
    %1598 = vmatprep.subr.mxu0 0.0
    %1599 = vmatpush2.msra.mxu0 0.0
    %1600 = vmatprep.subr.mxu0 0.0
    %1601 = vmatpush2.msra.mxu0 0.0
    %1602 = vmatprep.subr.mxu0 0.0
    %1603 = vmatpush2.msra.mxu0 0.0
    %1604 = vmatprep.subr.mxu0 0.0
    %1605 = vmatpush2.msra.mxu0 0.0
    %1606 = vmatprep.subr.mxu0 0.0
    %1607 = vmatpush2.msra.mxu0 0.0
    %1608 = vmatprep.subr.mxu0 0.0
    %1609 = vmatpush2.msra.mxu0 0.0
    %1610 = vmatprep.subr.mxu0 0.0
    %1611 = vmatpush2.msra.mxu0 0.0
    %1612 = vmatprep.subr.mxu0 0.0
    %1613 = vmatpush2.msra.mxu0 0.0
    %1614 = vmatprep.subr.mxu0 0.0
    %1615 = vmatpush2.msra.mxu0 0.0
    %1616 = vmatprep.subr.mxu0 0.0
    %1617 = vmatpush2.msra.mxu0 0.0
    %1618 = vmatprep.subr.mxu0 0.0
    %1619 = vmatpush2.msra.mxu0 0.0
    %1620 = vmatprep.subr.mxu0 0.0
    %1621 = vmatpush2.msra.mxu0 0.0
    %1622 = vmatprep.subr.mxu0 0.0
    %1623 = vmatpush2.msra.mxu0 0.0
    %1624 = vmatprep.subr.mxu0 0.0
    %1625 = vmatpush2.msra.mxu0 0.0
    %1626 = vmatprep.mubr.f32.mxu0 0.0
    %1627 = vmatmul.mubr.f32.gmra.mxu0 %v1560
    %v1628 = vpop.f32.mrf.mxu0
    %v1629 = vadd.f32 0.0, %v1628
    %v1630 = vpop.f32.mrf.mxu0
    %1631 = vdwg.mxu0
    %1634 = vrot.lane.b32.xlu0 %v892, 8
    %v1635 = vpop.permute.xlu0 %1634
    %1636 = vrot.lane.b32.xlu0 %v969, 8
    %v1637 = vpop.permute.xlu0 %1636
    %1642 = vrot.lane.b32.xlu0 %v1223, 16
    %v1643 = vpop.permute.xlu0 %1642
    %1644 = vrot.lane.b32.xlu0 %v1299, 16
    %v1645 = vpop.permute.xlu0 %1644
    %1650 = vrot.lane.b32.xlu0 %v1553, 24
    %v1651 = vpop.permute.xlu0 %1650
    %1652 = vrot.lane.b32.xlu0 %v1629, 24
    %v1653 = vpop.permute.xlu0 %1652
    %v1656 = vsel %vm319, %v564, %v1635
    %v1657 = vsel %vm319, %v637, %v1637
    %vm1658 = vcmask 130048
    %v1659 = vsel %vm1658, %v1656, %v1643
    %v1660 = vsel %vm1658, %v1657, %v1645
    %vm1661 = vcmask 195584
    %v1662 = vsel %vm1661, %v1659, %v1651
    %v1663 = vsel %vm1661, %v1660, %v1653
    %v1664 = vlaneseq
    %v1665 = vshrl.u32 %v1664, 7
    %v1666 = vsub.s32 0, %v1665
    %v1667 = vrot.slane %v45, %v1666
    %1668 = vrot.lane.b32.xlu0 %v32, 32
    %v1669 = vpop.permute.xlu0 %1668
    %1670 = vrot.lane.b32.xlu0 %v33, 32
    %v1671 = vpop.permute.xlu0 %1670
    %1672 = vrot.lane.b32.xlu0 %v34, 32
    %v1673 = vpop.permute.xlu0 %1672
    %1674 = vrot.lane.b32.xlu0 %v35, 32
    %v1675 = vpop.permute.xlu0 %1674
    %v1681 = vsel %vm47, %v1662, 0
    %v1684 = vsel %vm47, %v1663, 0
    %1686 = vmatprep.subr.mxu0 0.0
    %1687 = vmatpush1.msra.mxu0 0.0
    %1688 = vmatprep.subr.mxu0 0.0
    %1689 = vmatpush1.msra.mxu0 0.0
    %1690 = vmatprep.subr.mxu0 0.0
    %1691 = vmatpush1.msra.mxu0 0.0
    %1692 = vmatprep.subr.mxu0 0.0
    %1693 = vmatpush1.msra.mxu0 0.0
    %1694 = vmatprep.subr.mxu0 0.0
    %1695 = vmatpush1.msra.mxu0 0.0
    %1696 = vmatprep.subr.mxu0 0.0
    %1697 = vmatpush1.msra.mxu0 0.0
    %1698 = vmatprep.subr.mxu0 0.0
    %1699 = vmatpush1.msra.mxu0 0.0
    %1700 = vmatprep.subr.mxu0 0.0
    %1701 = vmatpush1.msra.mxu0 0.0
    %1702 = vmatprep.subr.mxu0 0.0
    %1703 = vmatpush1.msra.mxu0 0.0
    %1704 = vmatprep.subr.mxu0 0.0
    %1705 = vmatpush1.msra.mxu0 0.0
    %1706 = vmatprep.subr.mxu0 0.0
    %1707 = vmatpush1.msra.mxu0 0.0
    %1708 = vmatprep.subr.mxu0 0.0
    %1709 = vmatpush1.msra.mxu0 0.0
    %1710 = vmatprep.subr.mxu0 0.0
    %1711 = vmatpush1.msra.mxu0 %v1675
    %1712 = vmatprep.subr.mxu0 0.0
    %1713 = vmatpush1.msra.mxu0 %v1673
    %1714 = vmatprep.subr.mxu0 0.0
    %1715 = vmatpush1.msra.mxu0 %v1671
    %1716 = vmatprep.subr.mxu0 0.0
    %1717 = vmatpush1.msra.mxu0 %v1669
    %1718 = vmatprep.subr.mxu0 0.0
    %1719 = vmatpush2.msra.mxu0 0.0
    %1720 = vmatprep.subr.mxu0 0.0
    %1721 = vmatpush2.msra.mxu0 0.0
    %1722 = vmatprep.subr.mxu0 0.0
    %1723 = vmatpush2.msra.mxu0 0.0
    %1724 = vmatprep.subr.mxu0 0.0
    %1725 = vmatpush2.msra.mxu0 0.0
    %1726 = vmatprep.subr.mxu0 0.0
    %1727 = vmatpush2.msra.mxu0 0.0
    %1728 = vmatprep.subr.mxu0 0.0
    %1729 = vmatpush2.msra.mxu0 0.0
    %1730 = vmatprep.subr.mxu0 0.0
    %1731 = vmatpush2.msra.mxu0 0.0
    %1732 = vmatprep.subr.mxu0 0.0
    %1733 = vmatpush2.msra.mxu0 0.0
    %1734 = vmatprep.subr.mxu0 0.0
    %1735 = vmatpush2.msra.mxu0 0.0
    %1736 = vmatprep.subr.mxu0 0.0
    %1737 = vmatpush2.msra.mxu0 0.0
    %1738 = vmatprep.subr.mxu0 0.0
    %1739 = vmatpush2.msra.mxu0 0.0
    %1740 = vmatprep.subr.mxu0 0.0
    %1741 = vmatpush2.msra.mxu0 0.0
    %1742 = vmatprep.subr.mxu0 0.0
    %1743 = vmatpush2.msra.mxu0 0.0
    %1744 = vmatprep.subr.mxu0 0.0
    %1745 = vmatpush2.msra.mxu0 0.0
    %1746 = vmatprep.subr.mxu0 0.0
    %1747 = vmatpush2.msra.mxu0 0.0
    %1748 = vmatprep.subr.mxu0 0.0
    %1749 = vmatpush2.msra.mxu0 0.0
    %1750 = vmatprep.mubr.f32.mxu0 0.0
    %1751 = vmatmul.mubr.f32.gmra.mxu0 %v1681
    %v1752 = vpop.f32.mrf.mxu0
    %v1753 = vadd.f32 %v1667, %v1752
    %v1754 = vpop.f32.mrf.mxu0
    %1755 = vmatprep.mubr.f32.mxu0 0.0
    %1756 = vmatmul.mubr.f32.gmra.mxu0 %v1684
    %v1757 = vpop.f32.mrf.mxu0
    %v1758 = vadd.f32 %v1667, %v1757
    %v1759 = vpop.f32.mrf.mxu0
    %1760 = vdwg.mxu0
    %v1761 = vadd.f32 %v1753, %v30
    %v1762 = vadd.f32 %v1758, %v31
    %v1763 = vsel %vm47, %v1761, 0.0
    %1764 = vadd.xlane.f32.xlu0 %v1763
    %v1765 = vpop.xlane.xlu0 %1764
    %v1766 = vsel %vm47, %v1762, 0.0
    %1767 = vadd.xlane.f32.xlu0 %v1766
    %v1768 = vpop.xlane.xlu0 %1767
    %v1769 = vrcp.pop 32.0
    %v1770 = vmul.f32 %v1765, %v1769
    %v1771 = vmul.f32 %v1768, %v1769
    %v1772 = vsub.f32 %v1761, %v1770
    %v1773 = vsub.f32 %v1762, %v1771
    %v1774 = vmul.f32 %v1772, %v1772
    %v1775 = vmul.f32 %v1773, %v1773
    %v1776 = vsel %vm47, %v1774, 0.0
    %1777 = vadd.xlane.f32.xlu0 %v1776
    %v1778 = vpop.xlane.xlu0 %1777
    %v1779 = vsel %vm47, %v1775, 0.0
    %1780 = vadd.xlane.f32.xlu0 %v1779
    %v1781 = vpop.xlane.xlu0 %1780
    %v1782 = vmul.f32 %v1778, %v1769
    %v1783 = vmul.f32 %v1781, %v1769
    %v1784 = vadd.f32 %v1782, 1e-05
    %v1785 = vadd.f32 %v1783, 1e-05
    %v1786 = vrsqrt.pop %v1784
    %v1787 = vrsqrt.pop %v1785
    %v1788 = vmul.f32 %v1772, %v1786
    %v1789 = vmul.f32 %v1773, %v1787
    %1791 = vrot.lane.b32.xlu0 %v1667, 96
    %v1792 = vpop.permute.xlu0 %1791
    %v1794 = vmul.f32 %v1788, %v1792
    %v1795 = vmul.f32 %v1789, %v1792
    %1796 = vrot.lane.b32.xlu0 %v1667, 64
    %v1797 = vpop.permute.xlu0 %1796
    %v1799 = vadd.f32 %v1794, %v1797
    %v1800 = vadd.f32 %v1795, %v1797
    %v1801 = vlaneseq
    %v1802 = vshrl.u32 %v1801, 7
    %v1803 = vsub.s32 0, %v1802
    %v1804 = vrot.slane %v44, %v1803
    %v1806 = vsel %vm47, %v1799, 0
    %v1809 = vsel %vm47, %v1800, 0
    %1811 = vmatprep.subr.mxu0 0.0
    %1812 = vmatpush1.msra.mxu0 0.0
    %1813 = vmatprep.subr.mxu0 0.0
    %1814 = vmatpush1.msra.mxu0 0.0
    %1815 = vmatprep.subr.mxu0 0.0
    %1816 = vmatpush1.msra.mxu0 0.0
    %1817 = vmatprep.subr.mxu0 0.0
    %1818 = vmatpush1.msra.mxu0 0.0
    %1819 = vmatprep.subr.mxu0 0.0
    %1820 = vmatpush1.msra.mxu0 0.0
    %1821 = vmatprep.subr.mxu0 0.0
    %1822 = vmatpush1.msra.mxu0 0.0
    %1823 = vmatprep.subr.mxu0 0.0
    %1824 = vmatpush1.msra.mxu0 0.0
    %1825 = vmatprep.subr.mxu0 0.0
    %1826 = vmatpush1.msra.mxu0 0.0
    %1827 = vmatprep.subr.mxu0 0.0
    %1828 = vmatpush1.msra.mxu0 0.0
    %1829 = vmatprep.subr.mxu0 0.0
    %1830 = vmatpush1.msra.mxu0 0.0
    %1831 = vmatprep.subr.mxu0 0.0
    %1832 = vmatpush1.msra.mxu0 0.0
    %1833 = vmatprep.subr.mxu0 0.0
    %1834 = vmatpush1.msra.mxu0 0.0
    %1835 = vmatprep.subr.mxu0 0.0
    %1836 = vmatpush1.msra.mxu0 %v39
    %1837 = vmatprep.subr.mxu0 0.0
    %1838 = vmatpush1.msra.mxu0 %v38
    %1839 = vmatprep.subr.mxu0 0.0
    %1840 = vmatpush1.msra.mxu0 %v37
    %1841 = vmatprep.subr.mxu0 0.0
    %1842 = vmatpush1.msra.mxu0 %v36
    %1843 = vmatprep.subr.mxu0 0.0
    %1844 = vmatpush2.msra.mxu0 0.0
    %1845 = vmatprep.subr.mxu0 0.0
    %1846 = vmatpush2.msra.mxu0 0.0
    %1847 = vmatprep.subr.mxu0 0.0
    %1848 = vmatpush2.msra.mxu0 0.0
    %1849 = vmatprep.subr.mxu0 0.0
    %1850 = vmatpush2.msra.mxu0 0.0
    %1851 = vmatprep.subr.mxu0 0.0
    %1852 = vmatpush2.msra.mxu0 0.0
    %1853 = vmatprep.subr.mxu0 0.0
    %1854 = vmatpush2.msra.mxu0 0.0
    %1855 = vmatprep.subr.mxu0 0.0
    %1856 = vmatpush2.msra.mxu0 0.0
    %1857 = vmatprep.subr.mxu0 0.0
    %1858 = vmatpush2.msra.mxu0 0.0
    %1859 = vmatprep.subr.mxu0 0.0
    %1860 = vmatpush2.msra.mxu0 0.0
    %1861 = vmatprep.subr.mxu0 0.0
    %1862 = vmatpush2.msra.mxu0 0.0
    %1863 = vmatprep.subr.mxu0 0.0
    %1864 = vmatpush2.msra.mxu0 0.0
    %1865 = vmatprep.subr.mxu0 0.0
    %1866 = vmatpush2.msra.mxu0 0.0
    %1867 = vmatprep.subr.mxu0 0.0
    %1868 = vmatpush2.msra.mxu0 0.0
    %1869 = vmatprep.subr.mxu0 0.0
    %1870 = vmatpush2.msra.mxu0 0.0
    %1871 = vmatprep.subr.mxu0 0.0
    %1872 = vmatpush2.msra.mxu0 0.0
    %1873 = vmatprep.subr.mxu0 0.0
    %1874 = vmatpush2.msra.mxu0 0.0
    %1875 = vmatprep.mubr.f32.mxu0 0.0
    %1876 = vmatmul.mubr.f32.gmra.mxu0 %v1806
    %v1877 = vpop.f32.mrf.mxu0
    %v1878 = vadd.f32 %v1804, %v1877
    %v1879 = vpop.f32.mrf.mxu0
    %1880 = vmatprep.mubr.f32.mxu0 0.0
    %1881 = vmatmul.mubr.f32.gmra.mxu0 %v1809
    %v1882 = vpop.f32.mrf.mxu0
    %v1883 = vadd.f32 %v1804, %v1882
    %v1884 = vpop.f32.mrf.mxu0
    %1885 = vdwg.mxu0
    %v1886 = vmax.f32 %v1878, 0.0
    %v1887 = vmax.f32 %v1883, 0.0
    %v1888 = vlaneseq
    %v1889 = vshrl.u32 %v1888, 7
    %v1890 = vsub.s32 0, %v1889
    %v1891 = vrot.slane %v46, %v1890
    %1893 = vrot.lane.b32.xlu0 %v1891, 96
    %v1894 = vpop.permute.xlu0 %1893
    %1896 = vmatprep.subr.mxu0 0.0
    %1897 = vmatpush1.xpose.msra.mxu0 0.0
    %1898 = vmatprep.subr.mxu0 0.0
    %1899 = vmatpush1.xpose.msra.mxu0 0.0
    %1900 = vmatprep.subr.mxu0 0.0
    %1901 = vmatpush1.xpose.msra.mxu0 0.0
    %1902 = vmatprep.subr.mxu0 0.0
    %1903 = vmatpush1.xpose.msra.mxu0 0.0
    %1904 = vmatprep.subr.mxu0 0.0
    %1905 = vmatpush1.xpose.msra.mxu0 0.0
    %1906 = vmatprep.subr.mxu0 0.0
    %1907 = vmatpush1.xpose.msra.mxu0 0.0
    %1908 = vmatprep.subr.mxu0 0.0
    %1909 = vmatpush1.xpose.msra.mxu0 0.0
    %1910 = vmatprep.subr.mxu0 0.0
    %1911 = vmatpush1.xpose.msra.mxu0 0.0
    %1912 = vmatprep.subr.mxu0 0.0
    %1913 = vmatpush1.xpose.msra.mxu0 0.0
    %1914 = vmatprep.subr.mxu0 0.0
    %1915 = vmatpush1.xpose.msra.mxu0 0.0
    %1916 = vmatprep.subr.mxu0 0.0
    %1917 = vmatpush1.xpose.msra.mxu0 0.0
    %1918 = vmatprep.subr.mxu0 0.0
    %1919 = vmatpush1.xpose.msra.mxu0 0.0
    %1920 = vmatprep.subr.mxu0 0.0
    %1921 = vmatpush1.xpose.msra.mxu0 %v43
    %1922 = vmatprep.subr.mxu0 0.0
    %1923 = vmatpush1.xpose.msra.mxu0 %v42
    %1924 = vmatprep.subr.mxu0 0.0
    %1925 = vmatpush1.xpose.msra.mxu0 %v41
    %1926 = vmatprep.subr.mxu0 0.0
    %1927 = vmatpush1.xpose.msra.mxu0 %v40
    %1928 = vmatprep.subr.mxu0 0.0
    %1929 = vmatpush2.xpose.msra.mxu0 0.0
    %1930 = vmatprep.subr.mxu0 0.0
    %1931 = vmatpush2.xpose.msra.mxu0 0.0
    %1932 = vmatprep.subr.mxu0 0.0
    %1933 = vmatpush2.xpose.msra.mxu0 0.0
    %1934 = vmatprep.subr.mxu0 0.0
    %1935 = vmatpush2.xpose.msra.mxu0 0.0
    %1936 = vmatprep.subr.mxu0 0.0
    %1937 = vmatpush2.xpose.msra.mxu0 0.0
    %1938 = vmatprep.subr.mxu0 0.0
    %1939 = vmatpush2.xpose.msra.mxu0 0.0
    %1940 = vmatprep.subr.mxu0 0.0
    %1941 = vmatpush2.xpose.msra.mxu0 0.0
    %1942 = vmatprep.subr.mxu0 0.0
    %1943 = vmatpush2.xpose.msra.mxu0 0.0
    %1944 = vmatprep.subr.mxu0 0.0
    %1945 = vmatpush2.xpose.msra.mxu0 0.0
    %1946 = vmatprep.subr.mxu0 0.0
    %1947 = vmatpush2.xpose.msra.mxu0 0.0
    %1948 = vmatprep.subr.mxu0 0.0
    %1949 = vmatpush2.xpose.msra.mxu0 0.0
    %1950 = vmatprep.subr.mxu0 0.0
    %1951 = vmatpush2.xpose.msra.mxu0 0.0
    %1952 = vmatprep.subr.mxu0 0.0
    %1953 = vmatpush2.xpose.msra.mxu0 0.0
    %1954 = vmatprep.subr.mxu0 0.0
    %1955 = vmatpush2.xpose.msra.mxu0 0.0
    %1956 = vmatprep.subr.mxu0 0.0
    %1957 = vmatpush2.xpose.msra.mxu0 0.0
    %1958 = vmatprep.subr.mxu0 0.0
    %1959 = vmatpush2.xpose.msra.mxu0 0.0
    %1960 = vmatprep.mubr.f32.mxu0 0.0
    %1961 = vmatmul.mubr.f32.gmra.mxu0 %v1886
    %v1962 = vpop.f32.mrf.mxu0
    %v1963 = vadd.f32 %v1894, %v1962
    %v1964 = vpop.f32.mrf.mxu0
    %1965 = vmatprep.mubr.f32.mxu0 0.0
    %1966 = vmatmul.mubr.f32.gmra.mxu0 %v1887
    %v1967 = vpop.f32.mrf.mxu0
    %v1968 = vadd.f32 %v1894, %v1967
    %v1969 = vpop.f32.mrf.mxu0
    %1970 = vdwg.mxu0
    %v1971 = vadd.f32 %v1963, %v1799
    %v1972 = vadd.f32 %v1968, %v1800
    %v1973 = vsel %vm47, %v1971, 0.0
    %1974 = vadd.xlane.f32.xlu0 %v1973
    %v1975 = vpop.xlane.xlu0 %1974
    %v1976 = vsel %vm47, %v1972, 0.0
    %1977 = vadd.xlane.f32.xlu0 %v1976
    %v1978 = vpop.xlane.xlu0 %1977
    %v1979 = vmul.f32 %v1975, %v1769
    %v1980 = vmul.f32 %v1978, %v1769
    %v1981 = vsub.f32 %v1971, %v1979
    %v1982 = vsub.f32 %v1972, %v1980
    %v1983 = vmul.f32 %v1981, %v1981
    %v1984 = vmul.f32 %v1982, %v1982
    %v1985 = vsel %vm47, %v1983, 0.0
    %1986 = vadd.xlane.f32.xlu0 %v1985
    %v1987 = vpop.xlane.xlu0 %1986
    %v1988 = vsel %vm47, %v1984, 0.0
    %1989 = vadd.xlane.f32.xlu0 %v1988
    %v1990 = vpop.xlane.xlu0 %1989
    %v1991 = vmul.f32 %v1987, %v1769
    %v1992 = vmul.f32 %v1990, %v1769
    %v1993 = vadd.f32 %v1991, 1e-05
    %v1994 = vadd.f32 %v1992, 1e-05
    %v1995 = vrsqrt.pop %v1993
    %v1996 = vrsqrt.pop %v1994
    %v1997 = vmul.f32 %v1981, %v1995
    %v1998 = vmul.f32 %v1982, %v1996
    %1999 = vrot.lane.b32.xlu0 %v1667, 32
    %v2000 = vpop.permute.xlu0 %1999
    %v2002 = vmul.f32 %v1997, %v2000
    %v2003 = vmul.f32 %v1998, %v2000
    %v2004 = vadd.f32 %v2002, %v1891
    %v2005 = vadd.f32 %v2003, %v1891
    %2006 = vst.msk [vmem:[#allocation5] sm:$0xff] %vm47, %v2004
    %2007 = vst.msk [vmem:[#allocation5 + $0x8] sm:$0xff] %vm47, %v2005
    // Predicated region
    $region14: #{tpu_custom_call.1} parent=1 // pred_check
      _
    $region15: #{tpu_custom_call.1} parent=1 // pred_check_branch
      %2009 = sbr.rel (0) target = $region17
    $region16: #{tpu_custom_call.1} parent=1 // pred_region
      %s2011 = ssub.s32 256, 256
      %2012 = vsyncadd [#allocation4], %s2011
      %s2013 = sshll.u32 [#allocation5], 4
      %s2014 = int_to_ptr.vmem [resolvable:$true] %s2013
      %2019 = dma.vmem_to_hbm [thread:$0]  %s2014, 256, %s2, [#allocation4], 128, 128, 8
    $region17: #{tpu_custom_call.1} parent=1 // pred_fallthru
      _
    // Predicated region
    $region18: #{tpu_custom_call.1} parent=1 // pred_check
      _
    $region19: #{tpu_custom_call.1} parent=1 // pred_check_branch
      %2021 = sbr.rel (0) target = $region21
    $region20: #{tpu_custom_call.1} parent=1 // pred_region
      %2022 = dma.done [#allocation4], 256
    $region21: #{tpu_custom_call.1} parent=1 // pred_fallthru
      _
    %2023 = vsyncpa [#allocation3], 1
    %2024 = vsyncpa [#allocation4], 1

</llo_original>
